<compile_context>
chip_gen: v6e
topology: v6e:2x2x1
jax: 0.10.0
libtpu: 0.0.40
codegen_flags: <defaults>
</compile_context>

<pallas_src>
import functools

import jax
import jax.numpy as jnp
from jax import lax
from jax.experimental import pallas as pl
from jax.experimental.pallas import tpu as pltpu


CH = 8   # all channel planes are zero-padded to 8 sublanes


# --------------------------------------------------------------------------
# In-kernel helpers
# --------------------------------------------------------------------------
def _compress_even_lanes(v, out_len):
    """out[:, k] = v[:, 2*k] for k < out_len (2*out_len must be a power of 2).

    log2(2*out_len)-1 steps of (lane shift via slice+concat) + select; uses
    only ops that lower on every TPU generation (no gathers, no lane-strided
    loads, no O(H^4) selector constant).
    """
    n = 2 * out_len
    pos = lax.broadcasted_iota(jnp.int32, (1, n), 1)
    w = v
    b = 2
    while b < n:
        s = b // 2
        shifted = jnp.concatenate([w[:, s:], w[:, :s]], axis=1)
        r = pos & (2 * b - 1)
        take = (r >= s) & (r < b)
        w = jnp.where(take, shifted, w)
        b *= 2
    return w[:, :out_len]


# --------------------------------------------------------------------------
# Fused encoder kernel: conv1 -> conv2 -> stride-2 -> conv3 -> conv4 -> fc
# --------------------------------------------------------------------------
def _encoder_kernel(x_ref, convw_ref, convb_ref, fc_ref, o_ref, pad_ref, *,
                    width, pad_off):
    m_full = width * width
    half = width // 2
    m_half = half * half

    # Zero the staging buffer ONCE per grid step.  The left halo and the
    # padded channel sublanes are never written afterwards, so they stay zero
    # for the whole kernel (padded weight columns are zero as well).
    pad_ref[...] = jnp.zeros(pad_ref.shape, pad_ref.dtype)

    def edge_masks(w_, m_):
        col = lax.broadcasted_iota(jnp.int32, (1, m_), 1)
        xcol = col & (w_ - 1)                       # power-of-two width
        left = (xcol >= 1).astype(jnp.float32)      # column x-1 exists
        right = (xcol < (w_ - 1)).astype(jnp.float32)
        return left, right

    def conv3x3_relu(idx, a, w_, m_, left, right):
        """relu(conv3x3(a) + b), stride 1, one MXU matmul (contraction 9*CH)."""
        pad_ref[0:a.shape[0], pad_off:pad_off + m_] = a
        blocks = []
        for oy in (-1, 0, 1):
            for ox in (-1, 0, 1):
                s = pad_off + oy * w_ + ox
                blk = pad_ref[:, s:s + m_]                     # (CH, m_)
                if ox == -1:
                    blk = blk * left        # zero taps that wrap across a row
                elif ox == 1:
                    blk = blk * right
                blocks.append(blk)
        stacked = jnp.concatenate(blocks, axis=0)              # (9*CH, m_)
        acc = jnp.dot(convw_ref[idx], stacked,
                      preferred_element_type=jnp.float32)      # (CH, m_)
        return jnp.maximum(acc + convb_ref[idx], 0.0)

    left_f, right_f = edge_masks(width, m_full)
    a0 = x_ref[0]                                              # (nc, H*W)
    a1 = conv3x3_relu(0, a0, width, m_full, left_f, right_f)
    a2f = conv3x3_relu(1, a1, width, m_full, left_f, right_f)  # conv2, stride 1

    # ---- stride-2 spatial downsample (keep even rows, then even columns) ----
    rows = jnp.concatenate(
        [a2f[:, (2 * r) * width:(2 * r + 1) * width] for r in range(half)],
        axis=1)                                                # (CH, half*width)
    a2 = _compress_even_lanes(rows, m_half)                    # (CH, m_half)

    # Half-resolution convs read up to pad_off + m_half + half + 1; clear the
    # stale lanes left over from the full-resolution staging.
    pad_ref[:, pad_off + m_half:pad_off + 2 * m_half] = jnp.zeros(
        (pad_ref.shape[0], m_half), pad_ref.dtype)

    left_h, right_h = edge_masks(half, m_half)
    a3 = conv3x3_relu(2, a2, half, m_half, left_h, right_h)
    a4 = conv3x3_relu(3, a3, half, m_half, left_h, right_h)

    # fc over the width axis as one block-diagonal matmul -> lane-dense slab.
    y = jnp.dot(a4, fc_ref[0:m_half, :], preferred_element_type=jnp.float32)
    y = jnp.maximum(y + fc_ref[m_half:m_half + 1, :], 0.0)     # (CH, (H/2)*32)
    o_ref[0] = y[0:o_ref.shape[1], :].astype(o_ref.dtype)


# --------------------------------------------------------------------------
# Parameter repacking (done once, outside the hot path)
# --------------------------------------------------------------------------
def _pack_conv_stacked(w_hwio, b):
    """(3,3,cin,cout) HWIO conv weight -> single (CH, 9*CH) stacked matrix."""
    kh, kw, cin, cout = w_hwio.shape
    assert (kh, kw) == (3, 3) and cin <= CH and cout <= CH
    w = jnp.transpose(w_hwio, (0, 1, 3, 2)).reshape(kh * kw, cout, cin)
    w = jnp.pad(w, ((0, 0), (0, CH - cout), (0, CH - cin)))    # (9, CH, CH)
    w = jnp.transpose(w, (1, 0, 2)).reshape(CH, kh * kw * CH)  # (CH, 9*CH)
    bp = jnp.pad(b, (0, CH - cout)).reshape(CH, 1)
    return w.astype(jnp.float32), bp.astype(jnp.float32)


def pack_params(params, im_size):
    assert im_size & (im_size - 1) == 0, "power-of-two spatial size expected"
    assert im_size >= 4
    ho = wo = im_size // 2
    n_fc, fin = params["wfc"].shape
    assert fin == wo, "fc in_features must equal im_size // 2"

    ws, bs = [], []
    for name in ("1", "2", "3", "4"):
        w, b = _pack_conv_stacked(params["w" + name], params["b" + name])
        ws.append(w)
        bs.append(b)

    # fc (applied over the width axis) as a block-diagonal (Ho*Wo, Ho*n_fc)
    # matrix; its bias is appended as one extra row so it ships as ONE slab.
    wfc = jnp.kron(jnp.eye(ho, dtype=jnp.float32),
                   params["wfc"].T.astype(jnp.float32))        # (ho*wo, ho*n_fc)
    bfc = jnp.tile(params["bfc"].reshape(1, n_fc),
                   (1, ho)).astype(jnp.float32)                # (1, ho*n_fc)

    return {
        "convw": jnp.stack(ws),                   # (4, CH, 9*CH)
        "convb": jnp.stack(bs),                   # (4, CH, 1)
        "fc": jnp.concatenate([wfc, bfc], 0),     # (ho*wo + 1, ho*n_fc)
    }


# --------------------------------------------------------------------------
# Full VAE_Encoder forward: one pallas_call
# --------------------------------------------------------------------------
def _full_spec(arr):
    nd = arr.ndim
    return pl.BlockSpec(arr.shape, lambda i, _nd=nd: (0,) * _nd)


@functools.partial(jax.jit, static_argnames=("nef", "n_fc"))
def vae_encoder_forward(x_nchw, packed, *, nef, n_fc):
    n, nc, h, w = x_nchw.shape
    assert h == w and (w & (w - 1)) == 0 and w >= 4
    ho = h // 2
    m = h * w
    # Halo offset must cover the largest tap shift (width + 1); keep it a
    # multiple of 128 so the central staging region stays lane-aligned.
    pad_off = max(128, ((w + 1 + 127) // 128) * 128)
    assert pad_off >= w + 1

    x3 = x_nchw.reshape(n, nc, m)   # NCHW flattens directly to (C, H*W) rows
    kernel = functools.partial(_encoder_kernel, width=w, pad_off=pad_off)

    out = pl.pallas_call(
        kernel,
        out_shape=jax.ShapeDtypeStruct((n, nef, ho * n_fc), jnp.float32),
        grid=(n,),
        in_specs=[
            pl.BlockSpec((1, nc, m), lambda i: (i, 0, 0)),
            _full_spec(packed["convw"]),
            _full_spec(packed["convb"]),
            _full_spec(packed["fc"]),
        ],
        out_specs=pl.BlockSpec((1, nef, ho * n_fc), lambda i: (i, 0, 0)),
        scratch_shapes=[pltpu.VMEM((CH, 2 * pad_off + m), jnp.float32)],
        compiler_params=pltpu.CompilerParams(
            dimension_semantics=("parallel",)),
    )(x3, packed["convw"], packed["convb"], packed["fc"])

    return out.reshape(n, nef, ho, n_fc)


# --------------------------------------------------------------------------
# Pure-JAX reference (f32, HIGHEST precision) for the numerical check
# --------------------------------------------------------------------------
def reference_forward(x_nchw, params):
    dn = ("NHWC", "HWIO", "NHWC")
    hi = lax.Precision.HIGHEST
    x = jnp.transpose(x_nchw, (0, 2, 3, 1))
    for name, s in (("1", 1), ("2", 2), ("3", 1), ("4", 1)):
        w, b = params["w" + name], params["b" + name]
        x = jax.nn.relu(
            lax.conv_general_dilated(x, w, (s, s), [(1, 1), (1, 1)],
                                     dimension_numbers=dn, precision=hi) + b)
    x = jnp.transpose(x, (0, 3, 1, 2))
    x = jax.nn.relu(
        jnp.einsum("nchw,ow->ncho", x, params["wfc"], precision=hi)
        + params["bfc"])
    return x


# --------------------------------------------------------------------------
# Deterministic parameter init (PyTorch-default-style uniform bounds)
# --------------------------------------------------------------------------
def init_conv(key, cin, cout, k=3):
    k1, k2 = jax.random.split(key)
    bound = 1.0 / (cin * k * k) ** 0.5
    w = jax.random.uniform(k1, (k, k, cin, cout), jnp.float32, -bound, bound)
    b = jax.random.uniform(k2, (cout,), jnp.float32, -bound, bound)
    return w, b


def init_linear(key, fin, fout):
    k1, k2 = jax.random.split(key)
    bound = 1.0 / fin ** 0.5
    w = jax.random.uniform(k1, (fout, fin), jnp.float32, -bound, bound)
    b = jax.random.uniform(k2, (fout,), jnp.float32, -bound, bound)
    return w, b


if __name__ == "__main__":
    # Small shapes consistent with the module: nc=3, nef=8, im_size=16
    nc, nef, im_size, batch = 3, 8, 16, 2
    n_fc = 32

    keys = jax.random.split(jax.random.PRNGKey(0), 7)
    params = {}
    params["w1"], params["b1"] = init_conv(keys[0], nc, nef // 2)
    # conv2 in_channels = nef//2 (see NOTE at top about the channel mismatch)
    params["w2"], params["b2"] = init_conv(keys[1], nef // 2, nef)
    params["w3"], params["b3"] = init_conv(keys[2], nef, nef)
    params["w4"], params["b4"] = init_conv(keys[3], nef, nef)
    params["wfc"], params["bfc"] = init_linear(keys[4], im_size // 2, n_fc)

    x = jax.random.normal(keys[5], (batch, nc, im_size, im_size), jnp.float32)

    packed = pack_params(params, im_size)
    out = jax.block_until_ready(
        vae_encoder_forward(x, packed, nef=nef, n_fc=n_fc))
    assert out.shape == (batch, nef, im_size // 2, n_fc), out.shape

    ref = reference_forward(x, params)
    # 2e-3 leaves headroom for the MXU's internal multi-pass f32 matmul modes.
    if not jnp.allclose(out, ref, atol=2e-3, rtol=2e-3):
        raise ValueError(
            "Pallas output does not match reference, max|diff|="
            f"{float(jnp.max(jnp.abs(out - ref))):.3e}")
    print("KERNEL_OK")
</pallas_src>

<mosaic_0001>
module attributes {stable_mosaic.version = 11 : i64} {
  func.func @_encoder_kernel(%arg0: i32, %arg1: memref<1x3x256xf32, #tpu.memory_space<vmem>>, %arg2: memref<4x8x72xf32, #tpu.memory_space<vmem>>, %arg3: memref<4x8x1xf32, #tpu.memory_space<vmem>>, %arg4: memref<65x256xf32, #tpu.memory_space<vmem>>, %arg5: memref<1x8x256xf32, #tpu.memory_space<vmem>>, %arg6: memref<8x512xf32, #tpu.memory_space<vmem>>) attributes {dimension_semantics = [#tpu.dimension_semantics<parallel>], iteration_bounds = array<i64: 2>, scalar_prefetch = 0 : i64, scratch_operands = 1 : i64, tpu.core_type = #tpu.core_type<tc>, window_params = [{transform_indices = @transform_0, window_bounds = array<i64: 1, 3, 256>}, {pipeline_mode = #tpu.pipeline_mode<synchronous>, transform_indices = @transform_1, window_bounds = array<i64: 4, 8, 72>}, {pipeline_mode = #tpu.pipeline_mode<synchronous>, transform_indices = @transform_2, window_bounds = array<i64: 4, 8, 1>}, {pipeline_mode = #tpu.pipeline_mode<synchronous>, transform_indices = @transform_3, window_bounds = array<i64: 65, 256>}, {transform_indices = @transform_4, window_bounds = array<i64: 1, 8, 256>}]} {
    %cst = arith.constant 0.000000e+00 : f32
    %0 = vector.broadcast %cst : f32 to vector<8x512xf32>
    %c0 = arith.constant 0 : index
    %c0_0 = arith.constant 0 : index
    %1 = vector.load %arg6[%c0, %c0_0] : memref<8x512xf32, #tpu.memory_space<vmem>>, vector<8x512xf32>
    tpu.vector_store %arg6[%c0, %c0_0], %0 {strides = array<i32>} : memref<8x512xf32, #tpu.memory_space<vmem>>, vector<8x512xf32>,
    %2 = tpu.iota {dimensions = array<i32: 1>} : vector<1x256xi32>
    %c15_i32 = arith.constant 15 : i32
    %3 = vector.broadcast %c15_i32 : i32 to vector<1x256xi32>
    %4 = arith.andi %2, %3 : vector<1x256xi32>
    %c1_i32 = arith.constant 1 : i32
    %5 = vector.broadcast %c1_i32 : i32 to vector<1x256xi32>
    %6 = arith.cmpi sge, %4, %5 : vector<1x256xi32>
    %7 = arith.extui %6 : vector<1x256xi1> to vector<1x256xi32>
    %8 = arith.sitofp %7 : vector<1x256xi32> to vector<1x256xf32>
    %c15_i32_1 = arith.constant 15 : i32
    %9 = vector.broadcast %c15_i32_1 : i32 to vector<1x256xi32>
    %10 = arith.cmpi slt, %4, %9 : vector<1x256xi32>
    %11 = arith.extui %10 : vector<1x256xi1> to vector<1x256xi32>
    %12 = arith.sitofp %11 : vector<1x256xi32> to vector<1x256xf32>
    %c0_2 = arith.constant 0 : index
    %c0_3 = arith.constant 0 : index
    %c0_4 = arith.constant 0 : index
    %13 = vector.load %arg1[%c0_2, %c0_3, %c0_4] : memref<1x3x256xf32, #tpu.memory_space<vmem>>, vector<1x3x256xf32>
    %14 = vector.shape_cast %13 : vector<1x3x256xf32> to vector<3x256xf32>
    %c0_5 = arith.constant 0 : index
    %c128 = arith.constant 128 : index
    %15 = vector.load %arg6[%c0_5, %c128] : memref<8x512xf32, #tpu.memory_space<vmem>>, vector<3x256xf32>
    tpu.vector_store %arg6[%c0_5, %c128], %14 {strides = array<i32>} : memref<8x512xf32, #tpu.memory_space<vmem>>, vector<3x256xf32>,
    %c0_6 = arith.constant 0 : index
    %c111 = arith.constant 111 : index
    %16 = vector.load %arg6[%c0_6, %c111] : memref<8x512xf32, #tpu.memory_space<vmem>>, vector<8x256xf32>
    %17 = vector.broadcast %8 : vector<1x256xf32> to vector<8x256xf32>
    %18 = arith.mulf %16, %17 : vector<8x256xf32>
    %c0_7 = arith.constant 0 : index
    %c112 = arith.constant 112 : index
    %19 = vector.load %arg6[%c0_7, %c112] : memref<8x512xf32, #tpu.memory_space<vmem>>, vector<8x256xf32>
    %c0_8 = arith.constant 0 : index
    %c113 = arith.constant 113 : index
    %20 = vector.load %arg6[%c0_8, %c113] : memref<8x512xf32, #tpu.memory_space<vmem>>, vector<8x256xf32>
    %21 = vector.broadcast %12 : vector<1x256xf32> to vector<8x256xf32>
    %22 = arith.mulf %20, %21 : vector<8x256xf32>
    %c0_9 = arith.constant 0 : index
    %c127 = arith.constant 127 : index
    %23 = vector.load %arg6[%c0_9, %c127] : memref<8x512xf32, #tpu.memory_space<vmem>>, vector<8x256xf32>
    %24 = vector.broadcast %8 : vector<1x256xf32> to vector<8x256xf32>
    %25 = arith.mulf %23, %24 : vector<8x256xf32>
    %c0_10 = arith.constant 0 : index
    %c128_11 = arith.constant 128 : index
    %26 = vector.load %arg6[%c0_10, %c128_11] : memref<8x512xf32, #tpu.memory_space<vmem>>, vector<8x256xf32>
    %c0_12 = arith.constant 0 : index
    %c129 = arith.constant 129 : index
    %27 = vector.load %arg6[%c0_12, %c129] : memref<8x512xf32, #tpu.memory_space<vmem>>, vector<8x256xf32>
    %28 = vector.broadcast %12 : vector<1x256xf32> to vector<8x256xf32>
    %29 = arith.mulf %27, %28 : vector<8x256xf32>
    %c0_13 = arith.constant 0 : index
    %c143 = arith.constant 143 : index
    %30 = vector.load %arg6[%c0_13, %c143] : memref<8x512xf32, #tpu.memory_space<vmem>>, vector<8x256xf32>
    %31 = vector.broadcast %8 : vector<1x256xf32> to vector<8x256xf32>
    %32 = arith.mulf %30, %31 : vector<8x256xf32>
    %c0_14 = arith.constant 0 : index
    %c144 = arith.constant 144 : index
    %33 = vector.load %arg6[%c0_14, %c144] : memref<8x512xf32, #tpu.memory_space<vmem>>, vector<8x256xf32>
    %c0_15 = arith.constant 0 : index
    %c145 = arith.constant 145 : index
    %34 = vector.load %arg6[%c0_15, %c145] : memref<8x512xf32, #tpu.memory_space<vmem>>, vector<8x256xf32>
    %35 = vector.broadcast %12 : vector<1x256xf32> to vector<8x256xf32>
    %36 = arith.mulf %34, %35 : vector<8x256xf32>
    %37 = tpu.concatenate %18, %19, %22, %25, %26, %29, %32, %33, %36 in 0 : vector<8x256xf32>, vector<8x256xf32>, vector<8x256xf32>, vector<8x256xf32>, vector<8x256xf32>, vector<8x256xf32>, vector<8x256xf32>, vector<8x256xf32>, vector<8x256xf32> -> vector<72x256xf32>
    %c0_16 = arith.constant 0 : index
    %c0_17 = arith.constant 0 : index
    %c0_18 = arith.constant 0 : index
    %38 = vector.load %arg2[%c0_16, %c0_17, %c0_18] : memref<4x8x72xf32, #tpu.memory_space<vmem>>, vector<1x8x72xf32>
    %39 = vector.shape_cast %38 : vector<1x8x72xf32> to vector<8x72xf32>
    %cst_19 = arith.constant dense<0.000000e+00> : vector<8x256xf32>
    %40 = tpu.matmul %39, %37, %cst_19 {dimension_numbers = #tpu.dot_dimension_numbers<[1], [0], [0], [1], [0, 0, 1, 1], [], []>} : vector<8x72xf32>, vector<72x256xf32>, vector<8x256xf32> -> vector<8x256xf32>
    %c0_20 = arith.constant 0 : index
    %c0_21 = arith.constant 0 : index
    %c0_22 = arith.constant 0 : index
    %41 = vector.load %arg3[%c0_20, %c0_21, %c0_22] : memref<4x8x1xf32, #tpu.memory_space<vmem>>, vector<1x8x1xf32>
    %42 = vector.shape_cast %41 : vector<1x8x1xf32> to vector<8x1xf32>
    %43 = vector.broadcast %42 : vector<8x1xf32> to vector<8x256xf32>
    %44 = arith.addf %40, %43 : vector<8x256xf32>
    %cst_23 = arith.constant 0.000000e+00 : f32
    %45 = vector.broadcast %cst_23 : f32 to vector<8x256xf32>
    %46 = arith.maximumf %44, %45 : vector<8x256xf32>
    %c0_24 = arith.constant 0 : index
    %c128_25 = arith.constant 128 : index
    %47 = vector.load %arg6[%c0_24, %c128_25] : memref<8x512xf32, #tpu.memory_space<vmem>>, vector<8x256xf32>
    tpu.vector_store %arg6[%c0_24, %c128_25], %46 {strides = array<i32>} : memref<8x512xf32, #tpu.memory_space<vmem>>, vector<8x256xf32>,
    %c0_26 = arith.constant 0 : index
    %c111_27 = arith.constant 111 : index
    %48 = vector.load %arg6[%c0_26, %c111_27] : memref<8x512xf32, #tpu.memory_space<vmem>>, vector<8x256xf32>
    %49 = vector.broadcast %8 : vector<1x256xf32> to vector<8x256xf32>
    %50 = arith.mulf %48, %49 : vector<8x256xf32>
    %c0_28 = arith.constant 0 : index
    %c112_29 = arith.constant 112 : index
    %51 = vector.load %arg6[%c0_28, %c112_29] : memref<8x512xf32, #tpu.memory_space<vmem>>, vector<8x256xf32>
    %c0_30 = arith.constant 0 : index
    %c113_31 = arith.constant 113 : index
    %52 = vector.load %arg6[%c0_30, %c113_31] : memref<8x512xf32, #tpu.memory_space<vmem>>, vector<8x256xf32>
    %53 = vector.broadcast %12 : vector<1x256xf32> to vector<8x256xf32>
    %54 = arith.mulf %52, %53 : vector<8x256xf32>
    %c0_32 = arith.constant 0 : index
    %c127_33 = arith.constant 127 : index
    %55 = vector.load %arg6[%c0_32, %c127_33] : memref<8x512xf32, #tpu.memory_space<vmem>>, vector<8x256xf32>
    %56 = vector.broadcast %8 : vector<1x256xf32> to vector<8x256xf32>
    %57 = arith.mulf %55, %56 : vector<8x256xf32>
    %c0_34 = arith.constant 0 : index
    %c128_35 = arith.constant 128 : index
    %58 = vector.load %arg6[%c0_34, %c128_35] : memref<8x512xf32, #tpu.memory_space<vmem>>, vector<8x256xf32>
    %c0_36 = arith.constant 0 : index
    %c129_37 = arith.constant 129 : index
    %59 = vector.load %arg6[%c0_36, %c129_37] : memref<8x512xf32, #tpu.memory_space<vmem>>, vector<8x256xf32>
    %60 = vector.broadcast %12 : vector<1x256xf32> to vector<8x256xf32>
    %61 = arith.mulf %59, %60 : vector<8x256xf32>
    %c0_38 = arith.constant 0 : index
    %c143_39 = arith.constant 143 : index
    %62 = vector.load %arg6[%c0_38, %c143_39] : memref<8x512xf32, #tpu.memory_space<vmem>>, vector<8x256xf32>
    %63 = vector.broadcast %8 : vector<1x256xf32> to vector<8x256xf32>
    %64 = arith.mulf %62, %63 : vector<8x256xf32>
    %c0_40 = arith.constant 0 : index
    %c144_41 = arith.constant 144 : index
    %65 = vector.load %arg6[%c0_40, %c144_41] : memref<8x512xf32, #tpu.memory_space<vmem>>, vector<8x256xf32>
    %c0_42 = arith.constant 0 : index
    %c145_43 = arith.constant 145 : index
    %66 = vector.load %arg6[%c0_42, %c145_43] : memref<8x512xf32, #tpu.memory_space<vmem>>, vector<8x256xf32>
    %67 = vector.broadcast %12 : vector<1x256xf32> to vector<8x256xf32>
    %68 = arith.mulf %66, %67 : vector<8x256xf32>
    %69 = tpu.concatenate %50, %51, %54, %57, %58, %61, %64, %65, %68 in 0 : vector<8x256xf32>, vector<8x256xf32>, vector<8x256xf32>, vector<8x256xf32>, vector<8x256xf32>, vector<8x256xf32>, vector<8x256xf32>, vector<8x256xf32>, vector<8x256xf32> -> vector<72x256xf32>
    %c1 = arith.constant 1 : index
    %c0_44 = arith.constant 0 : index
    %c0_45 = arith.constant 0 : index
    %70 = vector.load %arg2[%c1, %c0_44, %c0_45] : memref<4x8x72xf32, #tpu.memory_space<vmem>>, vector<1x8x72xf32>
    %71 = vector.shape_cast %70 : vector<1x8x72xf32> to vector<8x72xf32>
    %cst_46 = arith.constant dense<0.000000e+00> : vector<8x256xf32>
    %72 = tpu.matmul %71, %69, %cst_46 {dimension_numbers = #tpu.dot_dimension_numbers<[1], [0], [0], [1], [0, 0, 1, 1], [], []>} : vector<8x72xf32>, vector<72x256xf32>, vector<8x256xf32> -> vector<8x256xf32>
    %c1_47 = arith.constant 1 : index
    %c0_48 = arith.constant 0 : index
    %c0_49 = arith.constant 0 : index
    %73 = vector.load %arg3[%c1_47, %c0_48, %c0_49] : memref<4x8x1xf32, #tpu.memory_space<vmem>>, vector<1x8x1xf32>
    %74 = vector.shape_cast %73 : vector<1x8x1xf32> to vector<8x1xf32>
    %75 = vector.broadcast %74 : vector<8x1xf32> to vector<8x256xf32>
    %76 = arith.addf %72, %75 : vector<8x256xf32>
    %cst_50 = arith.constant 0.000000e+00 : f32
    %77 = vector.broadcast %cst_50 : f32 to vector<8x256xf32>
    %78 = arith.maximumf %76, %77 : vector<8x256xf32>
    %79 = vector.extract_strided_slice %78 {offsets = [0, 0], sizes = [8, 16], strides = [1, 1]} : vector<8x256xf32> to vector<8x16xf32>
    %80 = vector.extract_strided_slice %78 {offsets = [0, 32], sizes = [8, 16], strides = [1, 1]} : vector<8x256xf32> to vector<8x16xf32>
    %81 = vector.extract_strided_slice %78 {offsets = [0, 64], sizes = [8, 16], strides = [1, 1]} : vector<8x256xf32> to vector<8x16xf32>
    %82 = vector.extract_strided_slice %78 {offsets = [0, 96], sizes = [8, 16], strides = [1, 1]} : vector<8x256xf32> to vector<8x16xf32>
    %83 = vector.extract_strided_slice %78 {offsets = [0, 128], sizes = [8, 16], strides = [1, 1]} : vector<8x256xf32> to vector<8x16xf32>
    %84 = vector.extract_strided_slice %78 {offsets = [0, 160], sizes = [8, 16], strides = [1, 1]} : vector<8x256xf32> to vector<8x16xf32>
    %85 = vector.extract_strided_slice %78 {offsets = [0, 192], sizes = [8, 16], strides = [1, 1]} : vector<8x256xf32> to vector<8x16xf32>
    %86 = vector.extract_strided_slice %78 {offsets = [0, 224], sizes = [8, 16], strides = [1, 1]} : vector<8x256xf32> to vector<8x16xf32>
    %87 = tpu.concatenate %79, %80, %81, %82, %83, %84, %85, %86 in 1 : vector<8x16xf32>, vector<8x16xf32>, vector<8x16xf32>, vector<8x16xf32>, vector<8x16xf32>, vector<8x16xf32>, vector<8x16xf32>, vector<8x16xf32> -> vector<8x128xf32>
    %88 = tpu.iota {dimensions = array<i32: 1>} : vector<1x128xi32>
    %89 = vector.extract_strided_slice %87 {offsets = [0, 1], sizes = [8, 127], strides = [1, 1]} : vector<8x128xf32> to vector<8x127xf32>
    %90 = vector.extract_strided_slice %87 {offsets = [0, 0], sizes = [8, 1], strides = [1, 1]} : vector<8x128xf32> to vector<8x1xf32>
    %91 = tpu.concatenate %89, %90 in 1 : vector<8x127xf32>, vector<8x1xf32> -> vector<8x128xf32>
    %c3_i32 = arith.constant 3 : i32
    %92 = vector.broadcast %c3_i32 : i32 to vector<1x128xi32>
    %93 = arith.andi %88, %92 : vector<1x128xi32>
    %c1_i32_51 = arith.constant 1 : i32
    %94 = vector.broadcast %c1_i32_51 : i32 to vector<1x128xi32>
    %95 = arith.cmpi sge, %93, %94 : vector<1x128xi32>
    %c2_i32 = arith.constant 2 : i32
    %96 = vector.broadcast %c2_i32 : i32 to vector<1x128xi32>
    %97 = arith.cmpi slt, %93, %96 : vector<1x128xi32>
    %98 = arith.andi %95, %97 : vector<1x128xi1>
    %99 = vector.shape_cast %98 : vector<1x128xi1> to vector<1x128xi1>
    %100 = vector.broadcast %99 : vector<1x128xi1> to vector<8x128xi1>
    %101 = arith.select %100, %91, %87 : vector<8x128xi1>, vector<8x128xf32>
    %102 = vector.extract_strided_slice %101 {offsets = [0, 2], sizes = [8, 126], strides = [1, 1]} : vector<8x128xf32> to vector<8x126xf32>
    %103 = vector.extract_strided_slice %101 {offsets = [0, 0], sizes = [8, 2], strides = [1, 1]} : vector<8x128xf32> to vector<8x2xf32>
    %104 = tpu.concatenate %102, %103 in 1 : vector<8x126xf32>, vector<8x2xf32> -> vector<8x128xf32>
    %c7_i32 = arith.constant 7 : i32
    %105 = vector.broadcast %c7_i32 : i32 to vector<1x128xi32>
    %106 = arith.andi %88, %105 : vector<1x128xi32>
    %c2_i32_52 = arith.constant 2 : i32
    %107 = vector.broadcast %c2_i32_52 : i32 to vector<1x128xi32>
    %108 = arith.cmpi sge, %106, %107 : vector<1x128xi32>
    %c4_i32 = arith.constant 4 : i32
    %109 = vector.broadcast %c4_i32 : i32 to vector<1x128xi32>
    %110 = arith.cmpi slt, %106, %109 : vector<1x128xi32>
    %111 = arith.andi %108, %110 : vector<1x128xi1>
    %112 = vector.shape_cast %111 : vector<1x128xi1> to vector<1x128xi1>
    %113 = vector.broadcast %112 : vector<1x128xi1> to vector<8x128xi1>
    %114 = arith.select %113, %104, %101 : vector<8x128xi1>, vector<8x128xf32>
    %115 = vector.extract_strided_slice %114 {offsets = [0, 4], sizes = [8, 124], strides = [1, 1]} : vector<8x128xf32> to vector<8x124xf32>
    %116 = vector.extract_strided_slice %114 {offsets = [0, 0], sizes = [8, 4], strides = [1, 1]} : vector<8x128xf32> to vector<8x4xf32>
    %117 = tpu.concatenate %115, %116 in 1 : vector<8x124xf32>, vector<8x4xf32> -> vector<8x128xf32>
    %c15_i32_53 = arith.constant 15 : i32
    %118 = vector.broadcast %c15_i32_53 : i32 to vector<1x128xi32>
    %119 = arith.andi %88, %118 : vector<1x128xi32>
    %c4_i32_54 = arith.constant 4 : i32
    %120 = vector.broadcast %c4_i32_54 : i32 to vector<1x128xi32>
    %121 = arith.cmpi sge, %119, %120 : vector<1x128xi32>
    %c8_i32 = arith.constant 8 : i32
    %122 = vector.broadcast %c8_i32 : i32 to vector<1x128xi32>
    %123 = arith.cmpi slt, %119, %122 : vector<1x128xi32>
    %124 = arith.andi %121, %123 : vector<1x128xi1>
    %125 = vector.shape_cast %124 : vector<1x128xi1> to vector<1x128xi1>
    %126 = vector.broadcast %125 : vector<1x128xi1> to vector<8x128xi1>
    %127 = arith.select %126, %117, %114 : vector<8x128xi1>, vector<8x128xf32>
    %128 = vector.extract_strided_slice %127 {offsets = [0, 8], sizes = [8, 120], strides = [1, 1]} : vector<8x128xf32> to vector<8x120xf32>
    %129 = vector.extract_strided_slice %127 {offsets = [0, 0], sizes = [8, 8], strides = [1, 1]} : vector<8x128xf32> to vector<8x8xf32>
    %130 = tpu.concatenate %128, %129 in 1 : vector<8x120xf32>, vector<8x8xf32> -> vector<8x128xf32>
    %c31_i32 = arith.constant 31 : i32
    %131 = vector.broadcast %c31_i32 : i32 to vector<1x128xi32>
    %132 = arith.andi %88, %131 : vector<1x128xi32>
    %c8_i32_55 = arith.constant 8 : i32
    %133 = vector.broadcast %c8_i32_55 : i32 to vector<1x128xi32>
    %134 = arith.cmpi sge, %132, %133 : vector<1x128xi32>
    %c16_i32 = arith.constant 16 : i32
    %135 = vector.broadcast %c16_i32 : i32 to vector<1x128xi32>
    %136 = arith.cmpi slt, %132, %135 : vector<1x128xi32>
    %137 = arith.andi %134, %136 : vector<1x128xi1>
    %138 = vector.shape_cast %137 : vector<1x128xi1> to vector<1x128xi1>
    %139 = vector.broadcast %138 : vector<1x128xi1> to vector<8x128xi1>
    %140 = arith.select %139, %130, %127 : vector<8x128xi1>, vector<8x128xf32>
    %141 = vector.extract_strided_slice %140 {offsets = [0, 16], sizes = [8, 112], strides = [1, 1]} : vector<8x128xf32> to vector<8x112xf32>
    %142 = vector.extract_strided_slice %140 {offsets = [0, 0], sizes = [8, 16], strides = [1, 1]} : vector<8x128xf32> to vector<8x16xf32>
    %143 = tpu.concatenate %141, %142 in 1 : vector<8x112xf32>, vector<8x16xf32> -> vector<8x128xf32>
    %c63_i32 = arith.constant 63 : i32
    %144 = vector.broadcast %c63_i32 : i32 to vector<1x128xi32>
    %145 = arith.andi %88, %144 : vector<1x128xi32>
    %c16_i32_56 = arith.constant 16 : i32
    %146 = vector.broadcast %c16_i32_56 : i32 to vector<1x128xi32>
    %147 = arith.cmpi sge, %145, %146 : vector<1x128xi32>
    %c32_i32 = arith.constant 32 : i32
    %148 = vector.broadcast %c32_i32 : i32 to vector<1x128xi32>
    %149 = arith.cmpi slt, %145, %148 : vector<1x128xi32>
    %150 = arith.andi %147, %149 : vector<1x128xi1>
    %151 = vector.shape_cast %150 : vector<1x128xi1> to vector<1x128xi1>
    %152 = vector.broadcast %151 : vector<1x128xi1> to vector<8x128xi1>
    %153 = arith.select %152, %143, %140 : vector<8x128xi1>, vector<8x128xf32>
    %154 = vector.extract_strided_slice %153 {offsets = [0, 32], sizes = [8, 96], strides = [1, 1]} : vector<8x128xf32> to vector<8x96xf32>
    %155 = vector.extract_strided_slice %153 {offsets = [0, 0], sizes = [8, 32], strides = [1, 1]} : vector<8x128xf32> to vector<8x32xf32>
    %156 = tpu.concatenate %154, %155 in 1 : vector<8x96xf32>, vector<8x32xf32> -> vector<8x128xf32>
    %c127_i32 = arith.constant 127 : i32
    %157 = vector.broadcast %c127_i32 : i32 to vector<1x128xi32>
    %158 = arith.andi %88, %157 : vector<1x128xi32>
    %c32_i32_57 = arith.constant 32 : i32
    %159 = vector.broadcast %c32_i32_57 : i32 to vector<1x128xi32>
    %160 = arith.cmpi sge, %158, %159 : vector<1x128xi32>
    %c64_i32 = arith.constant 64 : i32
    %161 = vector.broadcast %c64_i32 : i32 to vector<1x128xi32>
    %162 = arith.cmpi slt, %158, %161 : vector<1x128xi32>
    %163 = arith.andi %160, %162 : vector<1x128xi1>
    %164 = vector.shape_cast %163 : vector<1x128xi1> to vector<1x128xi1>
    %165 = vector.broadcast %164 : vector<1x128xi1> to vector<8x128xi1>
    %166 = arith.select %165, %156, %153 : vector<8x128xi1>, vector<8x128xf32>
    %167 = vector.extract_strided_slice %166 {offsets = [0, 0], sizes = [8, 64], strides = [1, 1]} : vector<8x128xf32> to vector<8x64xf32>
    %cst_58 = arith.constant 0.000000e+00 : f32
    %168 = vector.broadcast %cst_58 : f32 to vector<8x64xf32>
    %c0_59 = arith.constant 0 : index
    %c192 = arith.constant 192 : index
    %169 = vector.load %arg6[%c0_59, %c192] : memref<8x512xf32, #tpu.memory_space<vmem>>, vector<8x64xf32>
    tpu.vector_store %arg6[%c0_59, %c192], %168 {strides = array<i32>} : memref<8x512xf32, #tpu.memory_space<vmem>>, vector<8x64xf32>,
    %170 = tpu.iota {dimensions = array<i32: 1>} : vector<1x64xi32>
    %c7_i32_60 = arith.constant 7 : i32
    %171 = vector.broadcast %c7_i32_60 : i32 to vector<1x64xi32>
    %172 = arith.andi %170, %171 : vector<1x64xi32>
    %c1_i32_61 = arith.constant 1 : i32
    %173 = vector.broadcast %c1_i32_61 : i32 to vector<1x64xi32>
    %174 = arith.cmpi sge, %172, %173 : vector<1x64xi32>
    %175 = arith.extui %174 : vector<1x64xi1> to vector<1x64xi32>
    %176 = arith.sitofp %175 : vector<1x64xi32> to vector<1x64xf32>
    %c7_i32_62 = arith.constant 7 : i32
    %177 = vector.broadcast %c7_i32_62 : i32 to vector<1x64xi32>
    %178 = arith.cmpi slt, %172, %177 : vector<1x64xi32>
    %179 = arith.extui %178 : vector<1x64xi1> to vector<1x64xi32>
    %180 = arith.sitofp %179 : vector<1x64xi32> to vector<1x64xf32>
    %c0_63 = arith.constant 0 : index
    %c128_64 = arith.constant 128 : index
    %181 = vector.load %arg6[%c0_63, %c128_64] : memref<8x512xf32, #tpu.memory_space<vmem>>, vector<8x64xf32>
    tpu.vector_store %arg6[%c0_63, %c128_64], %167 {strides = array<i32>} : memref<8x512xf32, #tpu.memory_space<vmem>>, vector<8x64xf32>,
    %c0_65 = arith.constant 0 : index
    %c119 = arith.constant 119 : index
    %182 = vector.load %arg6[%c0_65, %c119] : memref<8x512xf32, #tpu.memory_space<vmem>>, vector<8x64xf32>
    %183 = vector.broadcast %176 : vector<1x64xf32> to vector<8x64xf32>
    %184 = arith.mulf %182, %183 : vector<8x64xf32>
    %c0_66 = arith.constant 0 : index
    %c120 = arith.constant 120 : index
    %185 = vector.load %arg6[%c0_66, %c120] : memref<8x512xf32, #tpu.memory_space<vmem>>, vector<8x64xf32>
    %c0_67 = arith.constant 0 : index
    %c121 = arith.constant 121 : index
    %186 = vector.load %arg6[%c0_67, %c121] : memref<8x512xf32, #tpu.memory_space<vmem>>, vector<8x64xf32>
    %187 = vector.broadcast %180 : vector<1x64xf32> to vector<8x64xf32>
    %188 = arith.mulf %186, %187 : vector<8x64xf32>
    %c0_68 = arith.constant 0 : index
    %c127_69 = arith.constant 127 : index
    %189 = vector.load %arg6[%c0_68, %c127_69] : memref<8x512xf32, #tpu.memory_space<vmem>>, vector<8x64xf32>
    %190 = vector.broadcast %176 : vector<1x64xf32> to vector<8x64xf32>
    %191 = arith.mulf %189, %190 : vector<8x64xf32>
    %c0_70 = arith.constant 0 : index
    %c128_71 = arith.constant 128 : index
    %192 = vector.load %arg6[%c0_70, %c128_71] : memref<8x512xf32, #tpu.memory_space<vmem>>, vector<8x64xf32>
    %c0_72 = arith.constant 0 : index
    %c129_73 = arith.constant 129 : index
    %193 = vector.load %arg6[%c0_72, %c129_73] : memref<8x512xf32, #tpu.memory_space<vmem>>, vector<8x64xf32>
    %194 = vector.broadcast %180 : vector<1x64xf32> to vector<8x64xf32>
    %195 = arith.mulf %193, %194 : vector<8x64xf32>
    %c0_74 = arith.constant 0 : index
    %c135 = arith.constant 135 : index
    %196 = vector.load %arg6[%c0_74, %c135] : memref<8x512xf32, #tpu.memory_space<vmem>>, vector<8x64xf32>
    %197 = vector.broadcast %176 : vector<1x64xf32> to vector<8x64xf32>
    %198 = arith.mulf %196, %197 : vector<8x64xf32>
    %c0_75 = arith.constant 0 : index
    %c136 = arith.constant 136 : index
    %199 = vector.load %arg6[%c0_75, %c136] : memref<8x512xf32, #tpu.memory_space<vmem>>, vector<8x64xf32>
    %c0_76 = arith.constant 0 : index
    %c137 = arith.constant 137 : index
    %200 = vector.load %arg6[%c0_76, %c137] : memref<8x512xf32, #tpu.memory_space<vmem>>, vector<8x64xf32>
    %201 = vector.broadcast %180 : vector<1x64xf32> to vector<8x64xf32>
    %202 = arith.mulf %200, %201 : vector<8x64xf32>
    %203 = tpu.concatenate %184, %185, %188, %191, %192, %195, %198, %199, %202 in 0 : vector<8x64xf32>, vector<8x64xf32>, vector<8x64xf32>, vector<8x64xf32>, vector<8x64xf32>, vector<8x64xf32>, vector<8x64xf32>, vector<8x64xf32>, vector<8x64xf32> -> vector<72x64xf32>
    %c2 = arith.constant 2 : index
    %c0_77 = arith.constant 0 : index
    %c0_78 = arith.constant 0 : index
    %204 = vector.load %arg2[%c2, %c0_77, %c0_78] : memref<4x8x72xf32, #tpu.memory_space<vmem>>, vector<1x8x72xf32>
    %205 = vector.shape_cast %204 : vector<1x8x72xf32> to vector<8x72xf32>
    %cst_79 = arith.constant dense<0.000000e+00> : vector<8x64xf32>
    %206 = tpu.matmul %205, %203, %cst_79 {dimension_numbers = #tpu.dot_dimension_numbers<[1], [0], [0], [1], [0, 0, 1, 1], [], []>} : vector<8x72xf32>, vector<72x64xf32>, vector<8x64xf32> -> vector<8x64xf32>
    %c2_80 = arith.constant 2 : index
    %c0_81 = arith.constant 0 : index
    %c0_82 = arith.constant 0 : index
    %207 = vector.load %arg3[%c2_80, %c0_81, %c0_82] : memref<4x8x1xf32, #tpu.memory_space<vmem>>, vector<1x8x1xf32>
    %208 = vector.shape_cast %207 : vector<1x8x1xf32> to vector<8x1xf32>
    %209 = vector.broadcast %208 : vector<8x1xf32> to vector<8x64xf32>
    %210 = arith.addf %206, %209 : vector<8x64xf32>
    %cst_83 = arith.constant 0.000000e+00 : f32
    %211 = vector.broadcast %cst_83 : f32 to vector<8x64xf32>
    %212 = arith.maximumf %210, %211 : vector<8x64xf32>
    %c0_84 = arith.constant 0 : index
    %c128_85 = arith.constant 128 : index
    %213 = vector.load %arg6[%c0_84, %c128_85] : memref<8x512xf32, #tpu.memory_space<vmem>>, vector<8x64xf32>
    tpu.vector_store %arg6[%c0_84, %c128_85], %212 {strides = array<i32>} : memref<8x512xf32, #tpu.memory_space<vmem>>, vector<8x64xf32>,
    %c0_86 = arith.constant 0 : index
    %c119_87 = arith.constant 119 : index
    %214 = vector.load %arg6[%c0_86, %c119_87] : memref<8x512xf32, #tpu.memory_space<vmem>>, vector<8x64xf32>
    %215 = vector.broadcast %176 : vector<1x64xf32> to vector<8x64xf32>
    %216 = arith.mulf %214, %215 : vector<8x64xf32>
    %c0_88 = arith.constant 0 : index
    %c120_89 = arith.constant 120 : index
    %217 = vector.load %arg6[%c0_88, %c120_89] : memref<8x512xf32, #tpu.memory_space<vmem>>, vector<8x64xf32>
    %c0_90 = arith.constant 0 : index
    %c121_91 = arith.constant 121 : index
    %218 = vector.load %arg6[%c0_90, %c121_91] : memref<8x512xf32, #tpu.memory_space<vmem>>, vector<8x64xf32>
    %219 = vector.broadcast %180 : vector<1x64xf32> to vector<8x64xf32>
    %220 = arith.mulf %218, %219 : vector<8x64xf32>
    %c0_92 = arith.constant 0 : index
    %c127_93 = arith.constant 127 : index
    %221 = vector.load %arg6[%c0_92, %c127_93] : memref<8x512xf32, #tpu.memory_space<vmem>>, vector<8x64xf32>
    %222 = vector.broadcast %176 : vector<1x64xf32> to vector<8x64xf32>
    %223 = arith.mulf %221, %222 : vector<8x64xf32>
    %c0_94 = arith.constant 0 : index
    %c128_95 = arith.constant 128 : index
    %224 = vector.load %arg6[%c0_94, %c128_95] : memref<8x512xf32, #tpu.memory_space<vmem>>, vector<8x64xf32>
    %c0_96 = arith.constant 0 : index
    %c129_97 = arith.constant 129 : index
    %225 = vector.load %arg6[%c0_96, %c129_97] : memref<8x512xf32, #tpu.memory_space<vmem>>, vector<8x64xf32>
    %226 = vector.broadcast %180 : vector<1x64xf32> to vector<8x64xf32>
    %227 = arith.mulf %225, %226 : vector<8x64xf32>
    %c0_98 = arith.constant 0 : index
    %c135_99 = arith.constant 135 : index
    %228 = vector.load %arg6[%c0_98, %c135_99] : memref<8x512xf32, #tpu.memory_space<vmem>>, vector<8x64xf32>
    %229 = vector.broadcast %176 : vector<1x64xf32> to vector<8x64xf32>
    %230 = arith.mulf %228, %229 : vector<8x64xf32>
    %c0_100 = arith.constant 0 : index
    %c136_101 = arith.constant 136 : index
    %231 = vector.load %arg6[%c0_100, %c136_101] : memref<8x512xf32, #tpu.memory_space<vmem>>, vector<8x64xf32>
    %c0_102 = arith.constant 0 : index
    %c137_103 = arith.constant 137 : index
    %232 = vector.load %arg6[%c0_102, %c137_103] : memref<8x512xf32, #tpu.memory_space<vmem>>, vector<8x64xf32>
    %233 = vector.broadcast %180 : vector<1x64xf32> to vector<8x64xf32>
    %234 = arith.mulf %232, %233 : vector<8x64xf32>
    %235 = tpu.concatenate %216, %217, %220, %223, %224, %227, %230, %231, %234 in 0 : vector<8x64xf32>, vector<8x64xf32>, vector<8x64xf32>, vector<8x64xf32>, vector<8x64xf32>, vector<8x64xf32>, vector<8x64xf32>, vector<8x64xf32>, vector<8x64xf32> -> vector<72x64xf32>
    %c3 = arith.constant 3 : index
    %c0_104 = arith.constant 0 : index
    %c0_105 = arith.constant 0 : index
    %236 = vector.load %arg2[%c3, %c0_104, %c0_105] : memref<4x8x72xf32, #tpu.memory_space<vmem>>, vector<1x8x72xf32>
    %237 = vector.shape_cast %236 : vector<1x8x72xf32> to vector<8x72xf32>
    %cst_106 = arith.constant dense<0.000000e+00> : vector<8x64xf32>
    %238 = tpu.matmul %237, %235, %cst_106 {dimension_numbers = #tpu.dot_dimension_numbers<[1], [0], [0], [1], [0, 0, 1, 1], [], []>} : vector<8x72xf32>, vector<72x64xf32>, vector<8x64xf32> -> vector<8x64xf32>
    %c3_107 = arith.constant 3 : index
    %c0_108 = arith.constant 0 : index
    %c0_109 = arith.constant 0 : index
    %239 = vector.load %arg3[%c3_107, %c0_108, %c0_109] : memref<4x8x1xf32, #tpu.memory_space<vmem>>, vector<1x8x1xf32>
    %240 = vector.shape_cast %239 : vector<1x8x1xf32> to vector<8x1xf32>
    %241 = vector.broadcast %240 : vector<8x1xf32> to vector<8x64xf32>
    %242 = arith.addf %238, %241 : vector<8x64xf32>
    %cst_110 = arith.constant 0.000000e+00 : f32
    %243 = vector.broadcast %cst_110 : f32 to vector<8x64xf32>
    %244 = arith.maximumf %242, %243 : vector<8x64xf32>
    %c0_111 = arith.constant 0 : index
    %c0_112 = arith.constant 0 : index
    %245 = vector.load %arg4[%c0_111, %c0_112] : memref<65x256xf32, #tpu.memory_space<vmem>>, vector<64x256xf32>
    %cst_113 = arith.constant dense<0.000000e+00> : vector<8x256xf32>
    %246 = tpu.matmul %244, %245, %cst_113 {dimension_numbers = #tpu.dot_dimension_numbers<[1], [0], [0], [1], [0, 0, 1, 1], [], []>} : vector<8x64xf32>, vector<64x256xf32>, vector<8x256xf32> -> vector<8x256xf32>
    %c64 = arith.constant 64 : index
    %c0_114 = arith.constant 0 : index
    %247 = vector.load %arg4[%c64, %c0_114] : memref<65x256xf32, #tpu.memory_space<vmem>>, vector<1x256xf32>
    %248 = vector.broadcast %247 : vector<1x256xf32> to vector<8x256xf32>
    %249 = arith.addf %246, %248 : vector<8x256xf32>
    %cst_115 = arith.constant 0.000000e+00 : f32
    %250 = vector.broadcast %cst_115 : f32 to vector<8x256xf32>
    %251 = arith.maximumf %249, %250 : vector<8x256xf32>
    %c0_116 = arith.constant 0 : index
    %c0_117 = arith.constant 0 : index
    %c0_118 = arith.constant 0 : index
    %252 = vector.load %arg5[%c0_116, %c0_117, %c0_118] : memref<1x8x256xf32, #tpu.memory_space<vmem>>, vector<1x8x256xf32>
    %253 = vector.shape_cast %252 : vector<1x8x256xf32> to vector<8x256xf32>
    %254 = vector.shape_cast %251 : vector<8x256xf32> to vector<1x8x256xf32>
    tpu.vector_store %arg5[%c0_116, %c0_117, %c0_118], %254 {strides = array<i32>} : memref<1x8x256xf32, #tpu.memory_space<vmem>>, vector<1x8x256xf32>,
    return
  }
  func.func @transform_0(%arg0: i32) -> (i32, i32, i32) {
    %c0_i32 = arith.constant 0 : i32
    %c0_i32_0 = arith.constant 0 : i32
    %c0_i32_1 = arith.constant 0 : i32
    return %arg0, %c0_i32, %c0_i32_0 : i32, i32, i32
  }
  func.func @transform_1(%arg0: i32) -> (i32, i32, i32) {
    %c0_i32 = arith.constant 0 : i32
    %c0_i32_0 = arith.constant 0 : i32
    %c0_i32_1 = arith.constant 0 : i32
    %c0_i32_2 = arith.constant 0 : i32
    return %c0_i32, %c0_i32_0, %c0_i32_1 : i32, i32, i32
  }
  func.func @transform_2(%arg0: i32) -> (i32, i32, i32) {
    %c0_i32 = arith.constant 0 : i32
    %c0_i32_0 = arith.constant 0 : i32
    %c0_i32_1 = arith.constant 0 : i32
    %c0_i32_2 = arith.constant 0 : i32
    return %c0_i32, %c0_i32_0, %c0_i32_1 : i32, i32, i32
  }
  func.func @transform_3(%arg0: i32) -> (i32, i32) {
    %c0_i32 = arith.constant 0 : i32
    %c0_i32_0 = arith.constant 0 : i32
    %c0_i32_1 = arith.constant 0 : i32
    return %c0_i32, %c0_i32_0 : i32, i32
  }
  func.func @transform_4(%arg0: i32) -> (i32, i32, i32) {
    %c0_i32 = arith.constant 0 : i32
    %c0_i32_0 = arith.constant 0 : i32
    %c0_i32_1 = arith.constant 0 : i32
    return %arg0, %c0_i32, %c0_i32_0 : i32, i32, i32
  }
}

</mosaic_0001>

<llo_original>
// kernel: vae_encoder_forward.1
$region0: #{vae_encoder_forward.1}
  #allocation0 [shape = 'u32[]', space=smem, size = 0x4, offset = 0x4, fixed_abs, tag = 'smem constant byte address 0x4 - core index']
  #allocation1 [shape = 'u32[144,128]{1,0:T(1,128)}', space=vmem, size = 0x12000, scoped, tag = 'internal scratch']
  #allocation2 [shape = 'f32[8,512]{1,0:T(8,128)}', space=vmem, size = 0x4000, scoped, tag = 'scratch operand']
  %s0 = inlined_call_operand.vmem [shape: f32[2,3,256], index: 0, kind: input, shape index: {}]
  %s1 = inlined_call_operand.hbm [shape: f32[4,8,72], index: 1, kind: input, shape index: {}]
  %s2 = inlined_call_operand.vmem [shape: f32[4,8,1], index: 2, kind: input, shape index: {}]
  %s3 = inlined_call_operand.vmem [shape: f32[65,256], index: 3, kind: input, shape index: {}]
  %s4 = inlined_call_operand.vmem [shape: f32[2,8,256], index: 4, kind: output, shape index: {}]
  %s5 = sld [smem:[#allocation0]]
  $region53: #{vae_encoder_forward.1} parent=0
    _
  %s7 = ssub.s32 1, %s5
  %s8 = scalar_select 0, %s7, %s5
  $region1: #{vae_encoder_forward.1} parent=0
    #allocation3 [shape = 'u8[16384]{0}', space=vmem, size = 0x4000, scoped, tag = 'input window, operand 1, single buffered']
    #allocation4 [shape = 's32[2]{0}', space=sflag, size = 0x8, scoped, tag = 'scoped memory for vae_encoder_forward.1']
    %9 = vsyncpa [#allocation4], 0
    loop: start=0, step=1, limit=4
    $region2: #{vae_encoder_forward.1} parent=1 // loop_pre_header
      _
    $region3: #{vae_encoder_forward.1} parent=1 // loop_header
      %s11 = sphi 0, %s15
      %p12 = scmp.ge.s32.totalorder %s11, 4
      %s21 = sphi 0, %s23
      %s24 = sphi 0, %s21
      %s25 = sphi 0, %s24
      %s41 = sphi 0, %s25
      %s45 = sphi 0, %s45
      %s47 = sphi 0, %s45
      %s48 = sphi 0, %s47
      %s62 = sphi 0, %s48
      %s66 = sphi 0, %s66
      %s68 = sphi 0, %s66
      %s69 = sphi 0, %s68
      %s83 = sphi 0, %s69
      %s87 = sphi 0, %s87
      %s89 = sphi 0, %s87
      %s90 = sphi 0, %s89
      %s104 = sphi 0, %s90
      %s110 = sphi 0, %s112
      %s113 = sphi 0, %s110
      %s114 = sphi 0, %s113
      %s130 = sphi 0, %s114
    $region4: #{vae_encoder_forward.1} parent=1 // loop_header_branch
      %14 = sbr.rel (%p12) target = $region8
    $region5: #{vae_encoder_forward.1} parent=1 // loop_body
      %s16 = ssub.s32 %s11, 1
      %s17 = ssub.s32 %s11, 2
      %s18 = sadd.s32 %s11, 1
      %s19 = ssub.s32 %s11, %s18
      %p20 = scmp.eq.s32.totalorder %s19, 0
      %s22 = sadd.s32 %s21, 1
      %s23 = scalar_select %p20, %s21, %s22
      %p26 = pneg %p20
      %p27 = scmp.eq.s32.totalorder %s11, 1
      %p28 = por %p26, %p27
      %p29 = scmp.ne.s32.totalorder %s21, %s24
      %p30 = scmp.eq.s32.totalorder %s11, 0
      %p31 = por %p29, %p30
      %p32 = scmp.ne.s32.totalorder %s21, %s24
      %p33 = scmp.eq.s32.totalorder %s16, 1
      %p34 = por %p32, %p33
      %p35 = scmp.ne.s32.totalorder %s24, %s25
      %p36 = scmp.eq.s32.totalorder %s16, 0
      %p37 = por %p35, %p36
      %p38 = scmp.ne.s32.totalorder %s24, %s25
      %p39 = scmp.eq.s32.totalorder %s17, 1
      %p40 = por %p38, %p39
      %p42 = scmp.ne.s32.totalorder %s25, %s41
      %p43 = scmp.eq.s32.totalorder %s17, 0
      %p44 = por %p42, %p43
      %s46 = sadd.s32 %s45, 1
      %p49 = scmp.eq.s32.totalorder %s11, 1
      %p50 = scmp.ne.s32.totalorder %s45, %s47
      %p51 = scmp.eq.s32.totalorder %s11, 0
      %p52 = por %p50, %p51
      %p53 = scmp.ne.s32.totalorder %s45, %s47
      %p54 = scmp.eq.s32.totalorder %s16, 1
      %p55 = por %p53, %p54
      %p56 = scmp.ne.s32.totalorder %s47, %s48
      %p57 = scmp.eq.s32.totalorder %s16, 0
      %p58 = por %p56, %p57
      %p59 = scmp.ne.s32.totalorder %s47, %s48
      %p60 = scmp.eq.s32.totalorder %s17, 1
      %p61 = por %p59, %p60
      %p63 = scmp.ne.s32.totalorder %s48, %s62
      %p64 = scmp.eq.s32.totalorder %s17, 0
      %p65 = por %p63, %p64
      %s67 = sadd.s32 %s66, 1
      %p70 = scmp.eq.s32.totalorder %s11, 1
      %p71 = scmp.ne.s32.totalorder %s66, %s68
      %p72 = scmp.eq.s32.totalorder %s11, 0
      %p73 = por %p71, %p72
      %p74 = scmp.ne.s32.totalorder %s66, %s68
      %p75 = scmp.eq.s32.totalorder %s16, 1
      %p76 = por %p74, %p75
      %p77 = scmp.ne.s32.totalorder %s68, %s69
      %p78 = scmp.eq.s32.totalorder %s16, 0
      %p79 = por %p77, %p78
      %p80 = scmp.ne.s32.totalorder %s68, %s69
      %p81 = scmp.eq.s32.totalorder %s17, 1
      %p82 = por %p80, %p81
      %p84 = scmp.ne.s32.totalorder %s69, %s83
      %p85 = scmp.eq.s32.totalorder %s17, 0
      %p86 = por %p84, %p85
      %s88 = sadd.s32 %s87, 1
      %p91 = scmp.eq.s32.totalorder %s11, 1
      %p92 = scmp.ne.s32.totalorder %s87, %s89
      %p93 = scmp.eq.s32.totalorder %s11, 0
      %p94 = por %p92, %p93
      %p95 = scmp.ne.s32.totalorder %s87, %s89
      %p96 = scmp.eq.s32.totalorder %s16, 1
      %p97 = por %p95, %p96
      %p98 = scmp.ne.s32.totalorder %s89, %s90
      %p99 = scmp.eq.s32.totalorder %s16, 0
      %p100 = por %p98, %p99
      %p101 = scmp.ne.s32.totalorder %s89, %s90
      %p102 = scmp.eq.s32.totalorder %s17, 1
      %p103 = por %p101, %p102
      %p105 = scmp.ne.s32.totalorder %s90, %s104
      %p106 = scmp.eq.s32.totalorder %s17, 0
      %p107 = por %p105, %p106
      %s108 = ssub.s32 %s11, %s18
      %p109 = scmp.eq.s32.totalorder %s108, 0
      %s111 = sadd.s32 %s110, 1
      %s112 = scalar_select %p109, %s110, %s111
      %p115 = pneg %p109
      %p116 = scmp.eq.s32.totalorder %s11, 1
      %p117 = por %p115, %p116
      %p118 = scmp.ne.s32.totalorder %s110, %s113
      %p119 = scmp.eq.s32.totalorder %s11, 0
      %p120 = por %p118, %p119
      %p121 = scmp.ne.s32.totalorder %s110, %s113
      %p122 = scmp.eq.s32.totalorder %s16, 1
      %p123 = por %p121, %p122
      %p124 = scmp.ne.s32.totalorder %s113, %s114
      %p125 = scmp.eq.s32.totalorder %s16, 0
      %p126 = por %p124, %p125
      %p127 = scmp.ne.s32.totalorder %s113, %s114
      %p128 = scmp.eq.s32.totalorder %s17, 1
      %p129 = por %p127, %p128
      %p131 = scmp.ne.s32.totalorder %s114, %s130
      %p132 = scmp.eq.s32.totalorder %s17, 0
      %p133 = por %p131, %p132
      %p134 = scmp.le.s32.totalorder 1, %s11
      %p135 = scmp.lt.s32.totalorder %s11, 3
      %p136 = pnand %p134, %p135
      %p137 = pneg %p136
      // Predicated region
      $region9: #{vae_encoder_forward.1} parent=5 // pred_check
        _
      $region10: #{vae_encoder_forward.1} parent=5 // pred_check_branch
        %139 = sbr.rel (%p136) target = $region12
      $region11: #{vae_encoder_forward.1} parent=5 // pred_region
        %s140 = ssub.s32 %s11, 1
        // Predicated region
        $region13: #{vae_encoder_forward.1} parent=11 // pred_check
          %p141 = pneg %p58
        $region14: #{vae_encoder_forward.1} parent=11 // pred_check_branch
          %143 = sbr.rel (%p141) target = $region16
        $region15: #{vae_encoder_forward.1} parent=11 // pred_region
          %s145 = ssub.s32 512, 512
          %146 = vsyncadd [#allocation4], %s145
          %s147 = sshll.u32 [#allocation3], 4
          %s148 = int_to_ptr.vmem [resolvable:$true] %s147
          %153 = dma.hbm_to_vmem [thread:$0]  %s1, 512, %s148, [#allocation4], 128, 128, 8
        $region16: #{vae_encoder_forward.1} parent=11 // pred_fallthru
          _
        // Predicated region
        $region17: #{vae_encoder_forward.1} parent=11 // pred_check
          %p154 = pneg %p79
        $region18: #{vae_encoder_forward.1} parent=11 // pred_check_branch
          %156 = sbr.rel (%p154) target = $region20
        $region19: #{vae_encoder_forward.1} parent=11 // pred_region
          _
        $region20: #{vae_encoder_forward.1} parent=11 // pred_fallthru
          _
        // Predicated region
        $region21: #{vae_encoder_forward.1} parent=11 // pred_check
          %p157 = pneg %p100
        $region22: #{vae_encoder_forward.1} parent=11 // pred_check_branch
          %159 = sbr.rel (%p157) target = $region24
        $region23: #{vae_encoder_forward.1} parent=11 // pred_region
          _
        $region24: #{vae_encoder_forward.1} parent=11 // pred_fallthru
          _
      $region12: #{vae_encoder_forward.1} parent=5 // pred_fallthru
        _
      %p160 = scmp.lt.s32.totalorder %s11, 2
      // Predicated region
      $region25: #{vae_encoder_forward.1} parent=5 // pred_check
        %p161 = pneg %p160
      $region26: #{vae_encoder_forward.1} parent=5 // pred_check_branch
        %163 = sbr.rel (%p161) target = $region28
      $region27: #{vae_encoder_forward.1} parent=5 // pred_region
        // Predicated region
        $region29: #{vae_encoder_forward.1} parent=27 // pred_check
          %p164 = pneg %p31
        $region30: #{vae_encoder_forward.1} parent=27 // pred_check_branch
          %166 = sbr.rel (%p164) target = $region32
        $region31: #{vae_encoder_forward.1} parent=27 // pred_region
          %p167 = scmp.lt.s32.totalorder %s11, 1
          %s168 = scalar_select %p167, %s11, 1
          %s169 = smul.addr %s168, 2
          %s170 = smul.addr %s169, 4
          %s171 = scalar_lea.vmem %s0, %s170
        $region32: #{vae_encoder_forward.1} parent=27 // pred_fallthru
          _
      $region28: #{vae_encoder_forward.1} parent=5 // pred_fallthru
        _
      %p172 = scmp.le.s32.totalorder 1, %s11
      %p173 = scmp.lt.s32.totalorder %s11, 3
      %p174 = pnand %p172, %p173
      %p175 = pneg %p174
      // Predicated region
      $region33: #{vae_encoder_forward.1} parent=5 // pred_check
        _
      $region34: #{vae_encoder_forward.1} parent=5 // pred_check_branch
        %177 = sbr.rel (%p174) target = $region36
      $region35: #{vae_encoder_forward.1} parent=5 // pred_region
        %s178 = ssub.s32 %s11, 1
        // Predicated region
        $region37: #{vae_encoder_forward.1} parent=35 // pred_check
          %p179 = pneg %p58
        $region38: #{vae_encoder_forward.1} parent=35 // pred_check_branch
          %181 = sbr.rel (%p179) target = $region40
        $region39: #{vae_encoder_forward.1} parent=35 // pred_region
          %182 = dma.done [#allocation4], 512
        $region40: #{vae_encoder_forward.1} parent=35 // pred_fallthru
          _
        %p183 = scmp.lt.s32.totalorder %s16, 1
        %s184 = scalar_select %p183, %s16, 1
        %s185 = smul.addr %s184, 2
        %s186 = smul.addr %s185, 4
        %s187 = scalar_lea.vmem %s0, %s186
        %p188 = pneg %p37
        %p189 = pneg %p34
        %p190 = pneg %p58
        %p191 = pneg %p55
        %p192 = pneg %p79
        %p193 = pneg %p76
        %p194 = pneg %p100
        %p195 = pneg %p97
        %p196 = pneg %p126
        %p197 = pneg %p123
        %p198 = scmp.lt.s32.totalorder %s16, 1
        %s199 = scalar_select %p198, %s16, 1
        %s200 = smul.addr %s199, 2
        %s201 = smul.addr %s200, 8
        %s202 = scalar_lea.vmem %s4, %s201
        %p203 = scmp.lt.s32.totalorder %s16, 1
        %s204 = scalar_select %p203, %s16, 1
        %s205 = smul.addr %s204, 2
        %s206 = smul.addr %s205, 4
        %s207 = scalar_lea.vmem %s0, %s206
        %p208 = scmp.lt.s32.totalorder %s16, 1
        %s209 = scalar_select %p208, %s16, 1
        %s210 = smul.addr %s209, 2
        %s211 = smul.addr %s210, 8
        %s212 = scalar_lea.vmem %s4, %s211
        %213 = vst [vmem:[#allocation2] sm:$0xff] 0.0
        %214 = vst [vmem:[#allocation2 + $0x8] sm:$0xff] 0.0
        %215 = vst [vmem:[#allocation2 + $0x10] sm:$0xff] 0.0
        %216 = vst [vmem:[#allocation2 + $0x18] sm:$0xff] 0.0
        %v217 = vlaneseq
        %v218 = vand.u32 %v217, 127
        %v219 = vadd.s32 %v218, 128
        %v220 = vand.u32 %v218, 15
        %v221 = vand.u32 %v219, 15
        %vm222 = vcmp.ge.s32.totalorder %v220, 1
        %vm223 = vcmp.ge.s32.totalorder %v221, 1
        %v224 = vsel %vm222, 1, 0
        %v225 = vsel %vm223, 1, 0
        %v226 = vcvt.s32.f32 %v224
        %v227 = vcvt.s32.f32 %v225
        %vm228 = vcmp.lt.s32.totalorder %v220, 15
        %vm229 = vcmp.lt.s32.totalorder %v221, 15
        %v230 = vsel %vm228, 1, 0
        %v231 = vsel %vm229, 1, 0
        %v232 = vcvt.s32.f32 %v230
        %v233 = vcvt.s32.f32 %v231
        %v234 = vld [vmem:[%s207] sm:$0x77]
        %v236 = vcombine.high %v234, %v234
        %238 = vst [vmem:[#allocation2 + $0x8] sm:$0x7] %v234
        %239 = vst [vmem:[#allocation2 + $0x10] sm:$0x7] %v236
        %v240 = vld [vmem:[#allocation2] sm:$0xff]
        %v241 = vld [vmem:[#allocation2 + $0x8] sm:$0xff]
        %v242 = vld [vmem:[#allocation2 + $0x10] sm:$0xff]
        %245 = vrot.lane.b32.xlu0 %v226, 111
        %v246 = vpop.permute.xlu0 %245
        %247 = vrot.lane.b32.xlu0 %v227, 111
        %v248 = vpop.permute.xlu0 %247
        %vm249 = vcmask 908288
        %v250 = vsel %vm249, %v246, %v248
        %v254 = vmul.f32 %v240, %v246
        %v255 = vmul.f32 %v241, %v250
        %v256 = vmul.f32 %v242, %v248
        %259 = vrot.lane.b32.xlu0 %v232, 113
        %v260 = vpop.permute.xlu0 %259
        %261 = vrot.lane.b32.xlu0 %v233, 113
        %v262 = vpop.permute.xlu0 %261
        %vm263 = vcmask 924672
        %v264 = vsel %vm263, %v260, %v262
        %v268 = vmul.f32 %v240, %v260
        %v269 = vmul.f32 %v241, %v264
        %v270 = vmul.f32 %v242, %v262
        %271 = vrot.lane.b32.xlu0 %v226, 127
        %v272 = vpop.permute.xlu0 %271
        %273 = vrot.lane.b32.xlu0 %v227, 127
        %v274 = vpop.permute.xlu0 %273
        %vm275 = vcmask 1039360
        %v276 = vsel %vm275, %v272, %v274
        %v280 = vmul.f32 %v240, %v272
        %v281 = vmul.f32 %v241, %v276
        %v282 = vmul.f32 %v242, %v274
        %v283 = vld [vmem:[#allocation2 + $0x8] sm:$0xff]
        %v284 = vld [vmem:[#allocation2 + $0x10] sm:$0xff]
        %v285 = vld [vmem:[#allocation2 + $0x18] sm:$0xff]
        %286 = vrot.lane.b32.xlu0 %v232, 1
        %v287 = vpop.permute.xlu0 %286
        %288 = vrot.lane.b32.xlu0 %v233, 1
        %v289 = vpop.permute.xlu0 %288
        %vm290 = vcmask 7168
        %v291 = vsel %vm290, %v287, %v289
        %v295 = vmul.f32 %v283, %v287
        %v296 = vmul.f32 %v284, %v291
        %v297 = vmul.f32 %v285, %v289
        %298 = vrot.lane.b32.xlu0 %v226, 15
        %v299 = vpop.permute.xlu0 %298
        %300 = vrot.lane.b32.xlu0 %v227, 15
        %v301 = vpop.permute.xlu0 %300
        %vm302 = vcmask 121856
        %v303 = vsel %vm302, %v299, %v301
        %v307 = vmul.f32 %v283, %v299
        %v308 = vmul.f32 %v284, %v303
        %v309 = vmul.f32 %v285, %v301
        %310 = vrot.lane.b32.xlu0 %v232, 17
        %v311 = vpop.permute.xlu0 %310
        %312 = vrot.lane.b32.xlu0 %v233, 17
        %v313 = vpop.permute.xlu0 %312
        %vm314 = vcmask 138240
        %v315 = vsel %vm314, %v311, %v313
        %v319 = vmul.f32 %v283, %v311
        %v320 = vmul.f32 %v284, %v315
        %v321 = vmul.f32 %v285, %v313
        %325 = vrot.lane.b32.xlu0 %v240, 127
        %v326 = vpop.permute.xlu0 %325
        %327 = vrot.lane.b32.xlu0 %v241, 127
        %v328 = vpop.permute.xlu0 %327
        %329 = vrot.lane.b32.xlu0 %v242, 127
        %v330 = vpop.permute.xlu0 %329
        %v331 = vsel %vm275, %v326, %v328
        %v332 = vsel %vm275, %v328, %v330
        %336 = vrot.lane.b32.xlu0 %v268, 126
        %v337 = vpop.permute.xlu0 %336
        %338 = vrot.lane.b32.xlu0 %v269, 126
        %v339 = vpop.permute.xlu0 %338
        %340 = vrot.lane.b32.xlu0 %v270, 126
        %v341 = vpop.permute.xlu0 %340
        %vm342 = vcmask 1031168
        %v343 = vsel %vm342, %v337, %v339
        %v344 = vsel %vm342, %v339, %v341
        %348 = vrot.lane.b32.xlu0 %v280, 112
        %v349 = vpop.permute.xlu0 %348
        %350 = vrot.lane.b32.xlu0 %v281, 112
        %v351 = vpop.permute.xlu0 %350
        %352 = vrot.lane.b32.xlu0 %v282, 112
        %v353 = vpop.permute.xlu0 %352
        %vm354 = vcmask 916480
        %v355 = vsel %vm354, %v349, %v351
        %v356 = vsel %vm354, %v351, %v353
        %357 = vrot.lane.b32.xlu0 %v241, 111
        %v358 = vpop.permute.xlu0 %357
        %359 = vrot.lane.b32.xlu0 %v242, 111
        %v360 = vpop.permute.xlu0 %359
        %v361 = vsel %vm249, %v358, %v360
        %365 = vrot.lane.b32.xlu0 %v295, 110
        %v366 = vpop.permute.xlu0 %365
        %367 = vrot.lane.b32.xlu0 %v296, 110
        %v368 = vpop.permute.xlu0 %367
        %369 = vrot.lane.b32.xlu0 %v297, 110
        %v370 = vpop.permute.xlu0 %369
        %vm371 = vcmask 900096
        %v372 = vsel %vm371, %v366, %v368
        %v373 = vsel %vm371, %v368, %v370
        %377 = vrot.lane.b32.xlu0 %v307, 96
        %v378 = vpop.permute.xlu0 %377
        %379 = vrot.lane.b32.xlu0 %v308, 96
        %v380 = vpop.permute.xlu0 %379
        %381 = vrot.lane.b32.xlu0 %v309, 96
        %v382 = vpop.permute.xlu0 %381
        %vm383 = vcmask 785408
        %v384 = vsel %vm383, %v378, %v380
        %v385 = vsel %vm383, %v380, %v382
        %389 = vrot.lane.b32.xlu0 %v283, 95
        %v390 = vpop.permute.xlu0 %389
        %391 = vrot.lane.b32.xlu0 %v284, 95
        %v392 = vpop.permute.xlu0 %391
        %393 = vrot.lane.b32.xlu0 %v285, 95
        %v394 = vpop.permute.xlu0 %393
        %vm395 = vcmask 777216
        %v396 = vsel %vm395, %v390, %v392
        %v397 = vsel %vm395, %v392, %v394
        %401 = vrot.lane.b32.xlu0 %v319, 94
        %v402 = vpop.permute.xlu0 %401
        %403 = vrot.lane.b32.xlu0 %v320, 94
        %v404 = vpop.permute.xlu0 %403
        %405 = vrot.lane.b32.xlu0 %v321, 94
        %v406 = vpop.permute.xlu0 %405
        %vm407 = vcmask 769024
        %v408 = vsel %vm407, %v402, %v404
        %v409 = vsel %vm407, %v404, %v406
        %v410 = vld [vmem:[#allocation3] sm:$0xff]
        %v411 = vld [vmem:[%s2] sm:$0xff]
        %413 = vset.pattern.permute.xlu0 0
        %414 = vperm.xlu0 %413, %v411
        %v415 = vpop.permute.xlu0 %414
        %420 = vrot.lane.b32.xlu0 %v254, 17
        %v421 = vpop.permute.xlu0 %420
        %422 = vrot.lane.b32.xlu0 %v255, 17
        %v423 = vpop.permute.xlu0 %422
        %424 = vrot.lane.b32.xlu0 %v256, 17
        %v425 = vpop.permute.xlu0 %424
        %426 = vrot.lane.b32.xlu0 %v331, 17
        %v427 = vpop.permute.xlu0 %426
        %428 = vrot.lane.b32.xlu0 %v332, 17
        %v429 = vpop.permute.xlu0 %428
        %430 = vrot.lane.b32.xlu0 %v330, 17
        %v431 = vpop.permute.xlu0 %430
        %432 = vrot.lane.b32.xlu0 %v343, 17
        %v433 = vpop.permute.xlu0 %432
        %434 = vrot.lane.b32.xlu0 %v344, 17
        %v435 = vpop.permute.xlu0 %434
        %436 = vrot.lane.b32.xlu0 %v341, 17
        %v437 = vpop.permute.xlu0 %436
        %438 = vrot.lane.b32.xlu0 %v355, 17
        %v439 = vpop.permute.xlu0 %438
        %440 = vrot.lane.b32.xlu0 %v356, 17
        %v441 = vpop.permute.xlu0 %440
        %442 = vrot.lane.b32.xlu0 %v353, 17
        %v443 = vpop.permute.xlu0 %442
        %444 = vrot.lane.b32.xlu0 %v358, 17
        %v445 = vpop.permute.xlu0 %444
        %446 = vrot.lane.b32.xlu0 %v361, 17
        %v447 = vpop.permute.xlu0 %446
        %448 = vrot.lane.b32.xlu0 %v360, 17
        %v449 = vpop.permute.xlu0 %448
        %450 = vrot.lane.b32.xlu0 %v366, 17
        %v451 = vpop.permute.xlu0 %450
        %452 = vrot.lane.b32.xlu0 %v372, 17
        %v453 = vpop.permute.xlu0 %452
        %454 = vrot.lane.b32.xlu0 %v373, 17
        %v455 = vpop.permute.xlu0 %454
        %456 = vrot.lane.b32.xlu0 %v378, 17
        %v457 = vpop.permute.xlu0 %456
        %458 = vrot.lane.b32.xlu0 %v384, 17
        %v459 = vpop.permute.xlu0 %458
        %460 = vrot.lane.b32.xlu0 %v385, 17
        %v461 = vpop.permute.xlu0 %460
        %462 = vrot.lane.b32.xlu0 %v390, 17
        %v463 = vpop.permute.xlu0 %462
        %464 = vrot.lane.b32.xlu0 %v396, 17
        %v465 = vpop.permute.xlu0 %464
        %466 = vrot.lane.b32.xlu0 %v397, 17
        %v467 = vpop.permute.xlu0 %466
        %468 = vrot.lane.b32.xlu0 %v402, 17
        %v469 = vpop.permute.xlu0 %468
        %470 = vrot.lane.b32.xlu0 %v408, 17
        %v471 = vpop.permute.xlu0 %470
        %472 = vrot.lane.b32.xlu0 %v409, 17
        %v473 = vpop.permute.xlu0 %472
        %v474 = vsel %vm314, %v421, %v423
        %v475 = vsel %vm314, %v423, %v425
        %v476 = vsel %vm314, %v427, %v429
        %v477 = vsel %vm314, %v429, %v431
        %v478 = vsel %vm314, %v433, %v435
        %v479 = vsel %vm314, %v435, %v437
        %v480 = vsel %vm314, %v439, %v441
        %v481 = vsel %vm314, %v441, %v443
        %v482 = vsel %vm314, %v445, %v447
        %v483 = vsel %vm314, %v447, %v449
        %v484 = vsel %vm314, %v451, %v453
        %v485 = vsel %vm314, %v453, %v455
        %v486 = vsel %vm314, %v457, %v459
        %v487 = vsel %vm314, %v459, %v461
        %v488 = vsel %vm314, %v463, %v465
        %v489 = vsel %vm314, %v465, %v467
        %v490 = vsel %vm314, %v469, %v471
        %v491 = vsel %vm314, %v471, %v473
        %vm510 = vcmask 588800
        %v512 = vsel %vm510, %v410, 0
        %514 = vmatprep.subr.mxu0 0.0
        %515 = vmatpush1.msra.mxu0 0.0
        %516 = vmatprep.subr.mxu0 0.0
        %517 = vmatpush1.msra.mxu0 0.0
        %518 = vmatprep.subr.mxu0 0.0
        %519 = vmatpush1.msra.mxu0 0.0
        %520 = vmatprep.subr.mxu0 0.0
        %521 = vmatpush1.msra.mxu0 0.0
        %522 = vmatprep.subr.mxu0 0.0
        %523 = vmatpush1.msra.mxu0 0.0
        %524 = vmatprep.subr.mxu0 0.0
        %525 = vmatpush1.msra.mxu0 0.0
        %526 = vmatprep.subr.mxu0 0.0
        %527 = vmatpush1.msra.mxu0 0.0
        %528 = vmatprep.subr.mxu0 %v491
        %529 = vmatpush1.msra.mxu0 %v490
        %530 = vmatprep.subr.mxu0 %v489
        %531 = vmatpush1.msra.mxu0 %v488
        %532 = vmatprep.subr.mxu0 %v487
        %533 = vmatpush1.msra.mxu0 %v486
        %534 = vmatprep.subr.mxu0 %v485
        %535 = vmatpush1.msra.mxu0 %v484
        %536 = vmatprep.subr.mxu0 %v483
        %537 = vmatpush1.msra.mxu0 %v482
        %538 = vmatprep.subr.mxu0 %v481
        %539 = vmatpush1.msra.mxu0 %v480
        %540 = vmatprep.subr.mxu0 %v479
        %541 = vmatpush1.msra.mxu0 %v478
        %542 = vmatprep.subr.mxu0 %v477
        %543 = vmatpush1.msra.mxu0 %v476
        %544 = vmatprep.subr.mxu0 %v475
        %545 = vmatpush1.msra.mxu0 %v474
        %546 = vmatprep.subr.mxu0 0.0
        %547 = vmatpush2.msra.mxu0 0.0
        %548 = vmatprep.subr.mxu0 0.0
        %549 = vmatpush2.msra.mxu0 0.0
        %550 = vmatprep.subr.mxu0 0.0
        %551 = vmatpush2.msra.mxu0 0.0
        %552 = vmatprep.subr.mxu0 0.0
        %553 = vmatpush2.msra.mxu0 0.0
        %554 = vmatprep.subr.mxu0 0.0
        %555 = vmatpush2.msra.mxu0 0.0
        %556 = vmatprep.subr.mxu0 0.0
        %557 = vmatpush2.msra.mxu0 0.0
        %558 = vmatprep.subr.mxu0 0.0
        %559 = vmatpush2.msra.mxu0 0.0
        %560 = vmatprep.subr.mxu0 0.0
        %561 = vmatpush2.msra.mxu0 0.0
        %562 = vmatprep.subr.mxu0 0.0
        %563 = vmatpush2.msra.mxu0 0.0
        %564 = vmatprep.subr.mxu0 0.0
        %565 = vmatpush2.msra.mxu0 0.0
        %566 = vmatprep.subr.mxu0 0.0
        %567 = vmatpush2.msra.mxu0 0.0
        %568 = vmatprep.subr.mxu0 0.0
        %569 = vmatpush2.msra.mxu0 0.0
        %570 = vmatprep.subr.mxu0 0.0
        %571 = vmatpush2.msra.mxu0 0.0
        %572 = vmatprep.subr.mxu0 0.0
        %573 = vmatpush2.msra.mxu0 0.0
        %574 = vmatprep.subr.mxu0 0.0
        %575 = vmatpush2.msra.mxu0 0.0
        %576 = vmatprep.subr.mxu0 0.0
        %577 = vmatpush2.msra.mxu0 0.0
        %578 = vmatprep.mubr.f32.mxu0 0.0
        %579 = vmatmul.mubr.f32.gmra.mxu0 %v512
        %v580 = vpop.f32.mrf.mxu0
        %v581 = vadd.f32 %v415, %v580
        %v582 = vpop.f32.mrf.mxu0
        %v583 = vadd.f32 %v415, %v582
        %584 = vdwg.mxu0
        %v585 = vmax.f32 %v581, 0.0
        %v586 = vmax.f32 %v583, 0.0
        %587 = vst [vmem:[#allocation2 + $0x8] sm:$0xff] %v585
        %588 = vst [vmem:[#allocation2 + $0x10] sm:$0xff] %v586
        %v589 = vld [vmem:[#allocation2] sm:$0xff]
        %v590 = vld [vmem:[#allocation2 + $0x8] sm:$0xff]
        %v591 = vld [vmem:[#allocation2 + $0x10] sm:$0xff]
        %v592 = vmul.f32 %v589, %v246
        %v593 = vmul.f32 %v590, %v250
        %v594 = vmul.f32 %v591, %v248
        %v595 = vmul.f32 %v589, %v260
        %v596 = vmul.f32 %v590, %v264
        %v597 = vmul.f32 %v591, %v262
        %v598 = vmul.f32 %v589, %v272
        %v599 = vmul.f32 %v590, %v276
        %v600 = vmul.f32 %v591, %v274
        %v601 = vld [vmem:[#allocation2 + $0x8] sm:$0xff]
        %v602 = vld [vmem:[#allocation2 + $0x10] sm:$0xff]
        %v603 = vld [vmem:[#allocation2 + $0x18] sm:$0xff]
        %v604 = vmul.f32 %v601, %v287
        %v605 = vmul.f32 %v602, %v291
        %v606 = vmul.f32 %v603, %v289
        %v607 = vmul.f32 %v601, %v299
        %v608 = vmul.f32 %v602, %v303
        %v609 = vmul.f32 %v603, %v301
        %v610 = vmul.f32 %v601, %v311
        %v611 = vmul.f32 %v602, %v315
        %v612 = vmul.f32 %v603, %v313
        %616 = vrot.lane.b32.xlu0 %v589, 127
        %v617 = vpop.permute.xlu0 %616
        %618 = vrot.lane.b32.xlu0 %v590, 127
        %v619 = vpop.permute.xlu0 %618
        %620 = vrot.lane.b32.xlu0 %v591, 127
        %v621 = vpop.permute.xlu0 %620
        %v622 = vsel %vm275, %v617, %v619
        %v623 = vsel %vm275, %v619, %v621
        %627 = vrot.lane.b32.xlu0 %v595, 126
        %v628 = vpop.permute.xlu0 %627
        %629 = vrot.lane.b32.xlu0 %v596, 126
        %v630 = vpop.permute.xlu0 %629
        %631 = vrot.lane.b32.xlu0 %v597, 126
        %v632 = vpop.permute.xlu0 %631
        %v633 = vsel %vm342, %v628, %v630
        %v634 = vsel %vm342, %v630, %v632
        %638 = vrot.lane.b32.xlu0 %v598, 112
        %v639 = vpop.permute.xlu0 %638
        %640 = vrot.lane.b32.xlu0 %v599, 112
        %v641 = vpop.permute.xlu0 %640
        %642 = vrot.lane.b32.xlu0 %v600, 112
        %v643 = vpop.permute.xlu0 %642
        %v644 = vsel %vm354, %v639, %v641
        %v645 = vsel %vm354, %v641, %v643
        %646 = vrot.lane.b32.xlu0 %v590, 111
        %v647 = vpop.permute.xlu0 %646
        %648 = vrot.lane.b32.xlu0 %v591, 111
        %v649 = vpop.permute.xlu0 %648
        %v650 = vsel %vm249, %v647, %v649
        %654 = vrot.lane.b32.xlu0 %v604, 110
        %v655 = vpop.permute.xlu0 %654
        %656 = vrot.lane.b32.xlu0 %v605, 110
        %v657 = vpop.permute.xlu0 %656
        %658 = vrot.lane.b32.xlu0 %v606, 110
        %v659 = vpop.permute.xlu0 %658
        %v660 = vsel %vm371, %v655, %v657
        %v661 = vsel %vm371, %v657, %v659
        %665 = vrot.lane.b32.xlu0 %v607, 96
        %v666 = vpop.permute.xlu0 %665
        %667 = vrot.lane.b32.xlu0 %v608, 96
        %v668 = vpop.permute.xlu0 %667
        %669 = vrot.lane.b32.xlu0 %v609, 96
        %v670 = vpop.permute.xlu0 %669
        %v671 = vsel %vm383, %v666, %v668
        %v672 = vsel %vm383, %v668, %v670
        %676 = vrot.lane.b32.xlu0 %v601, 95
        %v677 = vpop.permute.xlu0 %676
        %678 = vrot.lane.b32.xlu0 %v602, 95
        %v679 = vpop.permute.xlu0 %678
        %680 = vrot.lane.b32.xlu0 %v603, 95
        %v681 = vpop.permute.xlu0 %680
        %v682 = vsel %vm395, %v677, %v679
        %v683 = vsel %vm395, %v679, %v681
        %687 = vrot.lane.b32.xlu0 %v610, 94
        %v688 = vpop.permute.xlu0 %687
        %689 = vrot.lane.b32.xlu0 %v611, 94
        %v690 = vpop.permute.xlu0 %689
        %691 = vrot.lane.b32.xlu0 %v612, 94
        %v692 = vpop.permute.xlu0 %691
        %v693 = vsel %vm407, %v688, %v690
        %v694 = vsel %vm407, %v690, %v692
        %s695 = scalar_lea.vmem [#allocation3], 8
        %v696 = vld [vmem:[%s695] sm:$0xff]
        %s697 = scalar_lea.vmem %s2, 8
        %v698 = vld [vmem:[%s697] sm:$0xff]
        %700 = vset.pattern.permute.xlu0 0
        %701 = vperm.xlu0 %700, %v698
        %v702 = vpop.permute.xlu0 %701
        %707 = vrot.lane.b32.xlu0 %v592, 17
        %v708 = vpop.permute.xlu0 %707
        %709 = vrot.lane.b32.xlu0 %v593, 17
        %v710 = vpop.permute.xlu0 %709
        %711 = vrot.lane.b32.xlu0 %v594, 17
        %v712 = vpop.permute.xlu0 %711
        %713 = vrot.lane.b32.xlu0 %v622, 17
        %v714 = vpop.permute.xlu0 %713
        %715 = vrot.lane.b32.xlu0 %v623, 17
        %v716 = vpop.permute.xlu0 %715
        %717 = vrot.lane.b32.xlu0 %v621, 17
        %v718 = vpop.permute.xlu0 %717
        %719 = vrot.lane.b32.xlu0 %v633, 17
        %v720 = vpop.permute.xlu0 %719
        %721 = vrot.lane.b32.xlu0 %v634, 17
        %v722 = vpop.permute.xlu0 %721
        %723 = vrot.lane.b32.xlu0 %v632, 17
        %v724 = vpop.permute.xlu0 %723
        %725 = vrot.lane.b32.xlu0 %v644, 17
        %v726 = vpop.permute.xlu0 %725
        %727 = vrot.lane.b32.xlu0 %v645, 17
        %v728 = vpop.permute.xlu0 %727
        %729 = vrot.lane.b32.xlu0 %v643, 17
        %v730 = vpop.permute.xlu0 %729
        %731 = vrot.lane.b32.xlu0 %v647, 17
        %v732 = vpop.permute.xlu0 %731
        %733 = vrot.lane.b32.xlu0 %v650, 17
        %v734 = vpop.permute.xlu0 %733
        %735 = vrot.lane.b32.xlu0 %v649, 17
        %v736 = vpop.permute.xlu0 %735
        %737 = vrot.lane.b32.xlu0 %v655, 17
        %v738 = vpop.permute.xlu0 %737
        %739 = vrot.lane.b32.xlu0 %v660, 17
        %v740 = vpop.permute.xlu0 %739
        %741 = vrot.lane.b32.xlu0 %v661, 17
        %v742 = vpop.permute.xlu0 %741
        %743 = vrot.lane.b32.xlu0 %v666, 17
        %v744 = vpop.permute.xlu0 %743
        %745 = vrot.lane.b32.xlu0 %v671, 17
        %v746 = vpop.permute.xlu0 %745
        %747 = vrot.lane.b32.xlu0 %v672, 17
        %v748 = vpop.permute.xlu0 %747
        %749 = vrot.lane.b32.xlu0 %v677, 17
        %v750 = vpop.permute.xlu0 %749
        %751 = vrot.lane.b32.xlu0 %v682, 17
        %v752 = vpop.permute.xlu0 %751
        %753 = vrot.lane.b32.xlu0 %v683, 17
        %v754 = vpop.permute.xlu0 %753
        %755 = vrot.lane.b32.xlu0 %v688, 17
        %v756 = vpop.permute.xlu0 %755
        %757 = vrot.lane.b32.xlu0 %v693, 17
        %v758 = vpop.permute.xlu0 %757
        %759 = vrot.lane.b32.xlu0 %v694, 17
        %v760 = vpop.permute.xlu0 %759
        %v761 = vsel %vm314, %v708, %v710
        %v762 = vsel %vm314, %v710, %v712
        %v763 = vsel %vm314, %v714, %v716
        %v764 = vsel %vm314, %v716, %v718
        %v765 = vsel %vm314, %v720, %v722
        %v766 = vsel %vm314, %v722, %v724
        %v767 = vsel %vm314, %v726, %v728
        %v768 = vsel %vm314, %v728, %v730
        %v769 = vsel %vm314, %v732, %v734
        %v770 = vsel %vm314, %v734, %v736
        %v771 = vsel %vm314, %v738, %v740
        %v772 = vsel %vm314, %v740, %v742
        %v773 = vsel %vm314, %v744, %v746
        %v774 = vsel %vm314, %v746, %v748
        %v775 = vsel %vm314, %v750, %v752
        %v776 = vsel %vm314, %v752, %v754
        %v777 = vsel %vm314, %v756, %v758
        %v778 = vsel %vm314, %v758, %v760
        %v798 = vsel %vm510, %v696, 0
        %800 = vmatprep.subr.mxu0 0.0
        %801 = vmatpush1.msra.mxu0 0.0
        %802 = vmatprep.subr.mxu0 0.0
        %803 = vmatpush1.msra.mxu0 0.0
        %804 = vmatprep.subr.mxu0 0.0
        %805 = vmatpush1.msra.mxu0 0.0
        %806 = vmatprep.subr.mxu0 0.0
        %807 = vmatpush1.msra.mxu0 0.0
        %808 = vmatprep.subr.mxu0 0.0
        %809 = vmatpush1.msra.mxu0 0.0
        %810 = vmatprep.subr.mxu0 0.0
        %811 = vmatpush1.msra.mxu0 0.0
        %812 = vmatprep.subr.mxu0 0.0
        %813 = vmatpush1.msra.mxu0 0.0
        %814 = vmatprep.subr.mxu0 %v778
        %815 = vmatpush1.msra.mxu0 %v777
        %816 = vmatprep.subr.mxu0 %v776
        %817 = vmatpush1.msra.mxu0 %v775
        %818 = vmatprep.subr.mxu0 %v774
        %819 = vmatpush1.msra.mxu0 %v773
        %820 = vmatprep.subr.mxu0 %v772
        %821 = vmatpush1.msra.mxu0 %v771
        %822 = vmatprep.subr.mxu0 %v770
        %823 = vmatpush1.msra.mxu0 %v769
        %824 = vmatprep.subr.mxu0 %v768
        %825 = vmatpush1.msra.mxu0 %v767
        %826 = vmatprep.subr.mxu0 %v766
        %827 = vmatpush1.msra.mxu0 %v765
        %828 = vmatprep.subr.mxu0 %v764
        %829 = vmatpush1.msra.mxu0 %v763
        %830 = vmatprep.subr.mxu0 %v762
        %831 = vmatpush1.msra.mxu0 %v761
        %832 = vmatprep.subr.mxu0 0.0
        %833 = vmatpush2.msra.mxu0 0.0
        %834 = vmatprep.subr.mxu0 0.0
        %835 = vmatpush2.msra.mxu0 0.0
        %836 = vmatprep.subr.mxu0 0.0
        %837 = vmatpush2.msra.mxu0 0.0
        %838 = vmatprep.subr.mxu0 0.0
        %839 = vmatpush2.msra.mxu0 0.0
        %840 = vmatprep.subr.mxu0 0.0
        %841 = vmatpush2.msra.mxu0 0.0
        %842 = vmatprep.subr.mxu0 0.0
        %843 = vmatpush2.msra.mxu0 0.0
        %844 = vmatprep.subr.mxu0 0.0
        %845 = vmatpush2.msra.mxu0 0.0
        %846 = vmatprep.subr.mxu0 0.0
        %847 = vmatpush2.msra.mxu0 0.0
        %848 = vmatprep.subr.mxu0 0.0
        %849 = vmatpush2.msra.mxu0 0.0
        %850 = vmatprep.subr.mxu0 0.0
        %851 = vmatpush2.msra.mxu0 0.0
        %852 = vmatprep.subr.mxu0 0.0
        %853 = vmatpush2.msra.mxu0 0.0
        %854 = vmatprep.subr.mxu0 0.0
        %855 = vmatpush2.msra.mxu0 0.0
        %856 = vmatprep.subr.mxu0 0.0
        %857 = vmatpush2.msra.mxu0 0.0
        %858 = vmatprep.subr.mxu0 0.0
        %859 = vmatpush2.msra.mxu0 0.0
        %860 = vmatprep.subr.mxu0 0.0
        %861 = vmatpush2.msra.mxu0 0.0
        %862 = vmatprep.subr.mxu0 0.0
        %863 = vmatpush2.msra.mxu0 0.0
        %864 = vmatprep.mubr.f32.mxu0 0.0
        %865 = vmatmul.mubr.f32.gmra.mxu0 %v798
        %v866 = vpop.f32.mrf.mxu0
        %v867 = vadd.f32 %v702, %v866
        %v868 = vpop.f32.mrf.mxu0
        %v869 = vadd.f32 %v702, %v868
        %870 = vdwg.mxu0
        %v871 = vmax.f32 %v867, 0.0
        %v872 = vmax.f32 %v869, 0.0
        %874 = vrot.lane.b32.xlu0 %v871, 112
        %v875 = vpop.permute.xlu0 %874
        %877 = vrot.lane.b32.xlu0 %v871, 96
        %v878 = vpop.permute.xlu0 %877
        %880 = vrot.lane.b32.xlu0 %v871, 80
        %v881 = vpop.permute.xlu0 %880
        %884 = vrot.lane.b32.xlu0 %v872, 64
        %v885 = vpop.permute.xlu0 %884
        %887 = vrot.lane.b32.xlu0 %v872, 48
        %v888 = vpop.permute.xlu0 %887
        %890 = vrot.lane.b32.xlu0 %v872, 32
        %v891 = vpop.permute.xlu0 %890
        %893 = vrot.lane.b32.xlu0 %v872, 16
        %v894 = vpop.permute.xlu0 %893
        %vm896 = vcmask 130048
        %v897 = vsel %vm896, %v871, %v875
        %vm898 = vcmask 261120
        %v899 = vsel %vm898, %v897, %v878
        %vm900 = vcmask 392192
        %v901 = vsel %vm900, %v899, %v881
        %vm902 = vcmask 523264
        %v903 = vsel %vm902, %v901, %v885
        %vm904 = vcmask 654336
        %v905 = vsel %vm904, %v903, %v888
        %v906 = vsel %vm383, %v905, %v891
        %v907 = vsel %vm354, %v906, %v894
        %909 = vrot.lane.b32.xlu0 %v907, 127
        %v910 = vpop.permute.xlu0 %909
        %v912 = vand.u32 %v218, 3
        %vm913 = vcmp.ge.s32.totalorder %v912, 1
        %vm914 = vcmp.lt.s32.totalorder %v912, 2
        %vm915 = vmand %vm913, %vm914
        %v916 = vsel %vm915, 1, 0
        %vm917 = vcmp.eq.s32.totalorder %v916, 1
        %v918 = vsel %vm917, %v910, %v907
        %920 = vrot.lane.b32.xlu0 %v918, 126
        %v921 = vpop.permute.xlu0 %920
        %v923 = vand.u32 %v218, 7
        %vm924 = vcmp.ge.s32.totalorder %v923, 2
        %vm925 = vcmp.lt.s32.totalorder %v923, 4
        %vm926 = vmand %vm924, %vm925
        %v927 = vsel %vm926, 1, 0
        %vm928 = vcmp.eq.s32.totalorder %v927, 1
        %v929 = vsel %vm928, %v921, %v918
        %931 = vrot.lane.b32.xlu0 %v929, 124
        %v932 = vpop.permute.xlu0 %931
        %vm934 = vcmp.ge.s32.totalorder %v220, 4
        %vm935 = vcmp.lt.s32.totalorder %v220, 8
        %vm936 = vmand %vm934, %vm935
        %v937 = vsel %vm936, 1, 0
        %vm938 = vcmp.eq.s32.totalorder %v937, 1
        %v939 = vsel %vm938, %v932, %v929
        %941 = vrot.lane.b32.xlu0 %v939, 120
        %v942 = vpop.permute.xlu0 %941
        %vm944 = vcmask 982016
        %v945 = vand.u32 %v218, 31
        %vm946 = vcmp.ge.s32.totalorder %v945, 8
        %vm947 = vcmp.lt.s32.totalorder %v945, 16
        %vm948 = vmand %vm946, %vm947
        %v949 = vsel %vm948, 1, 0
        %vm950 = vcmp.eq.s32.totalorder %v949, 1
        %v951 = vsel %vm950, %v942, %v939
        %953 = vrot.lane.b32.xlu0 %v951, 112
        %v954 = vpop.permute.xlu0 %953
        %v956 = vand.u32 %v218, 63
        %vm957 = vcmp.ge.s32.totalorder %v956, 16
        %vm958 = vcmp.lt.s32.totalorder %v956, 32
        %vm959 = vmand %vm957, %vm958
        %v960 = vsel %vm959, 1, 0
        %vm961 = vcmp.eq.s32.totalorder %v960, 1
        %v962 = vsel %vm961, %v954, %v951
        %964 = vrot.lane.b32.xlu0 %v962, 96
        %v965 = vpop.permute.xlu0 %964
        %v967 = vand.u32 %v218, 127
        %vm968 = vcmp.ge.s32.totalorder %v967, 32
        %vm969 = vcmp.lt.s32.totalorder %v967, 64
        %vm970 = vmand %vm968, %vm969
        %v971 = vsel %vm970, 1, 0
        %vm972 = vcmp.eq.s32.totalorder %v971, 1
        %v973 = vsel %vm972, %v965, %v962
        %vm974 = vcmask 1048064
        %975 = vst.msk [vmem:[#allocation2 + $0x8] sm:$0xff] %vm974, 0.0
        %vm976 = vcmp.ge.s32.totalorder %v923, 1
        %v977 = vsel %vm976, 1, 0
        %v978 = vcvt.s32.f32 %v977
        %vm979 = vcmp.lt.s32.totalorder %v923, 7
        %v980 = vsel %vm979, 1, 0
        %v981 = vcvt.s32.f32 %v980
        %982 = vst.msk [vmem:[#allocation2 + $0x8] sm:$0xff] %vm902, %v973
        %v983 = vld [vmem:[#allocation2] sm:$0xff]
        %v984 = vld [vmem:[#allocation2 + $0x8] sm:$0xff]
        %986 = vrot.lane.b32.xlu0 %v978, 119
        %v987 = vpop.permute.xlu0 %986
        %v989 = vmul.f32 %v983, %v987
        %v990 = vmul.f32 %v984, %v987
        %992 = vrot.lane.b32.xlu0 %v981, 121
        %v993 = vpop.permute.xlu0 %992
        %v995 = vmul.f32 %v983, %v993
        %v996 = vmul.f32 %v984, %v993
        %997 = vrot.lane.b32.xlu0 %v978, 127
        %v998 = vpop.permute.xlu0 %997
        %v1000 = vmul.f32 %v983, %v998
        %v1001 = vmul.f32 %v984, %v998
        %1002 = vrot.lane.b32.xlu0 %v981, 1
        %v1003 = vpop.permute.xlu0 %1002
        %v1005 = vmul.f32 %v984, %v1003
        %1006 = vrot.lane.b32.xlu0 %v978, 7
        %v1007 = vpop.permute.xlu0 %1006
        %v1009 = vmul.f32 %v984, %v1007
        %1010 = vrot.lane.b32.xlu0 %v981, 9
        %v1011 = vpop.permute.xlu0 %1010
        %v1013 = vmul.f32 %v984, %v1011
        %1016 = vrot.lane.b32.xlu0 %v983, 127
        %v1017 = vpop.permute.xlu0 %1016
        %1018 = vrot.lane.b32.xlu0 %v984, 127
        %v1019 = vpop.permute.xlu0 %1018
        %v1020 = vsel %vm275, %v1017, %v1019
        %1023 = vrot.lane.b32.xlu0 %v995, 126
        %v1024 = vpop.permute.xlu0 %1023
        %1025 = vrot.lane.b32.xlu0 %v996, 126
        %v1026 = vpop.permute.xlu0 %1025
        %v1027 = vsel %vm342, %v1024, %v1026
        %1030 = vrot.lane.b32.xlu0 %v1000, 120
        %v1031 = vpop.permute.xlu0 %1030
        %1032 = vrot.lane.b32.xlu0 %v1001, 120
        %v1033 = vpop.permute.xlu0 %1032
        %v1034 = vsel %vm944, %v1031, %v1033
        %1035 = vrot.lane.b32.xlu0 %v984, 119
        %v1036 = vpop.permute.xlu0 %1035
        %1038 = vrot.lane.b32.xlu0 %v1005, 118
        %v1039 = vpop.permute.xlu0 %1038
        %1041 = vrot.lane.b32.xlu0 %v1009, 112
        %v1042 = vpop.permute.xlu0 %1041
        %1043 = vrot.lane.b32.xlu0 %v984, 111
        %v1044 = vpop.permute.xlu0 %1043
        %1046 = vrot.lane.b32.xlu0 %v1013, 110
        %v1047 = vpop.permute.xlu0 %1046
        %s1048 = scalar_lea.vmem [#allocation3], 16
        %v1049 = vld [vmem:[%s1048] sm:$0xff]
        %s1050 = scalar_lea.vmem %s2, 16
        %v1051 = vld [vmem:[%s1050] sm:$0xff]
        %1053 = vset.pattern.permute.xlu0 0
        %1054 = vperm.xlu0 %1053, %v1051
        %v1055 = vpop.permute.xlu0 %1054
        %1059 = vrot.lane.b32.xlu0 %v989, 9
        %v1060 = vpop.permute.xlu0 %1059
        %1061 = vrot.lane.b32.xlu0 %v990, 9
        %v1062 = vpop.permute.xlu0 %1061
        %1063 = vrot.lane.b32.xlu0 %v1020, 9
        %v1064 = vpop.permute.xlu0 %1063
        %1065 = vrot.lane.b32.xlu0 %v1019, 9
        %v1066 = vpop.permute.xlu0 %1065
        %1067 = vrot.lane.b32.xlu0 %v1027, 9
        %v1068 = vpop.permute.xlu0 %1067
        %1069 = vrot.lane.b32.xlu0 %v1026, 9
        %v1070 = vpop.permute.xlu0 %1069
        %1071 = vrot.lane.b32.xlu0 %v1034, 9
        %v1072 = vpop.permute.xlu0 %1071
        %1073 = vrot.lane.b32.xlu0 %v1033, 9
        %v1074 = vpop.permute.xlu0 %1073
        %1075 = vrot.lane.b32.xlu0 %v1036, 9
        %v1076 = vpop.permute.xlu0 %1075
        %1077 = vrot.lane.b32.xlu0 %v1039, 9
        %v1078 = vpop.permute.xlu0 %1077
        %1079 = vrot.lane.b32.xlu0 %v1042, 9
        %v1080 = vpop.permute.xlu0 %1079
        %1081 = vrot.lane.b32.xlu0 %v1044, 9
        %v1082 = vpop.permute.xlu0 %1081
        %1083 = vrot.lane.b32.xlu0 %v1047, 9
        %v1084 = vpop.permute.xlu0 %1083
        %vm1085 = vcmask 72704
        %v1086 = vsel %vm1085, %v1060, %v1062
        %v1087 = vsel %vm1085, %v1064, %v1066
        %v1088 = vsel %vm1085, %v1068, %v1070
        %v1089 = vsel %vm1085, %v1072, %v1074
        %v1100 = vsel %vm510, %v1049, 0
        %1102 = vmatprep.subr.mxu0 0.0
        %1103 = vmatpush1.msra.mxu0 0.0
        %1104 = vmatprep.subr.mxu0 0.0
        %1105 = vmatpush1.msra.mxu0 0.0
        %1106 = vmatprep.subr.mxu0 0.0
        %1107 = vmatpush1.msra.mxu0 0.0
        %1108 = vmatprep.subr.mxu0 0.0
        %1109 = vmatpush1.msra.mxu0 0.0
        %1110 = vmatprep.subr.mxu0 0.0
        %1111 = vmatpush1.msra.mxu0 0.0
        %1112 = vmatprep.subr.mxu0 0.0
        %1113 = vmatpush1.msra.mxu0 0.0
        %1114 = vmatprep.subr.mxu0 0.0
        %1115 = vmatpush1.msra.mxu0 0.0
        %1116 = vmatprep.subr.mxu0 0.0
        %1117 = vmatpush1.msra.mxu0 %v1084
        %1118 = vmatprep.subr.mxu0 0.0
        %1119 = vmatpush1.msra.mxu0 %v1082
        %1120 = vmatprep.subr.mxu0 0.0
        %1121 = vmatpush1.msra.mxu0 %v1080
        %1122 = vmatprep.subr.mxu0 0.0
        %1123 = vmatpush1.msra.mxu0 %v1078
        %1124 = vmatprep.subr.mxu0 0.0
        %1125 = vmatpush1.msra.mxu0 %v1076
        %1126 = vmatprep.subr.mxu0 0.0
        %1127 = vmatpush1.msra.mxu0 %v1089
        %1128 = vmatprep.subr.mxu0 0.0
        %1129 = vmatpush1.msra.mxu0 %v1088
        %1130 = vmatprep.subr.mxu0 0.0
        %1131 = vmatpush1.msra.mxu0 %v1087
        %1132 = vmatprep.subr.mxu0 0.0
        %1133 = vmatpush1.msra.mxu0 %v1086
        %1134 = vmatprep.subr.mxu0 0.0
        %1135 = vmatpush2.msra.mxu0 0.0
        %1136 = vmatprep.subr.mxu0 0.0
        %1137 = vmatpush2.msra.mxu0 0.0
        %1138 = vmatprep.subr.mxu0 0.0
        %1139 = vmatpush2.msra.mxu0 0.0
        %1140 = vmatprep.subr.mxu0 0.0
        %1141 = vmatpush2.msra.mxu0 0.0
        %1142 = vmatprep.subr.mxu0 0.0
        %1143 = vmatpush2.msra.mxu0 0.0
        %1144 = vmatprep.subr.mxu0 0.0
        %1145 = vmatpush2.msra.mxu0 0.0
        %1146 = vmatprep.subr.mxu0 0.0
        %1147 = vmatpush2.msra.mxu0 0.0
        %1148 = vmatprep.subr.mxu0 0.0
        %1149 = vmatpush2.msra.mxu0 0.0
        %1150 = vmatprep.subr.mxu0 0.0
        %1151 = vmatpush2.msra.mxu0 0.0
        %1152 = vmatprep.subr.mxu0 0.0
        %1153 = vmatpush2.msra.mxu0 0.0
        %1154 = vmatprep.subr.mxu0 0.0
        %1155 = vmatpush2.msra.mxu0 0.0
        %1156 = vmatprep.subr.mxu0 0.0
        %1157 = vmatpush2.msra.mxu0 0.0
        %1158 = vmatprep.subr.mxu0 0.0
        %1159 = vmatpush2.msra.mxu0 0.0
        %1160 = vmatprep.subr.mxu0 0.0
        %1161 = vmatpush2.msra.mxu0 0.0
        %1162 = vmatprep.subr.mxu0 0.0
        %1163 = vmatpush2.msra.mxu0 0.0
        %1164 = vmatprep.subr.mxu0 0.0
        %1165 = vmatpush2.msra.mxu0 0.0
        %1166 = vmatprep.mubr.f32.mxu0 0.0
        %1167 = vmatmul.mubr.f32.gmra.mxu0 %v1100
        %v1168 = vpop.f32.mrf.mxu0
        %v1169 = vadd.f32 %v1055, %v1168
        %v1170 = vpop.f32.mrf.mxu0
        %1171 = vdwg.mxu0
        %v1172 = vmax.f32 %v1169, 0.0
        %1173 = vst.msk [vmem:[#allocation2 + $0x8] sm:$0xff] %vm902, %v1172
        %v1174 = vld [vmem:[#allocation2] sm:$0xff]
        %v1175 = vld [vmem:[#allocation2 + $0x8] sm:$0xff]
        %v1176 = vmul.f32 %v1174, %v987
        %v1177 = vmul.f32 %v1175, %v987
        %v1178 = vmul.f32 %v1174, %v993
        %v1179 = vmul.f32 %v1175, %v993
        %v1180 = vmul.f32 %v1174, %v998
        %v1181 = vmul.f32 %v1175, %v998
        %v1182 = vmul.f32 %v1175, %v1003
        %v1183 = vmul.f32 %v1175, %v1007
        %v1184 = vmul.f32 %v1175, %v1011
        %1187 = vrot.lane.b32.xlu0 %v1174, 127
        %v1188 = vpop.permute.xlu0 %1187
        %1189 = vrot.lane.b32.xlu0 %v1175, 127
        %v1190 = vpop.permute.xlu0 %1189
        %v1191 = vsel %vm275, %v1188, %v1190
        %1194 = vrot.lane.b32.xlu0 %v1178, 126
        %v1195 = vpop.permute.xlu0 %1194
        %1196 = vrot.lane.b32.xlu0 %v1179, 126
        %v1197 = vpop.permute.xlu0 %1196
        %v1198 = vsel %vm342, %v1195, %v1197
        %1201 = vrot.lane.b32.xlu0 %v1180, 120
        %v1202 = vpop.permute.xlu0 %1201
        %1203 = vrot.lane.b32.xlu0 %v1181, 120
        %v1204 = vpop.permute.xlu0 %1203
        %v1205 = vsel %vm944, %v1202, %v1204
        %1206 = vrot.lane.b32.xlu0 %v1175, 119
        %v1207 = vpop.permute.xlu0 %1206
        %1209 = vrot.lane.b32.xlu0 %v1182, 118
        %v1210 = vpop.permute.xlu0 %1209
        %1212 = vrot.lane.b32.xlu0 %v1183, 112
        %v1213 = vpop.permute.xlu0 %1212
        %1214 = vrot.lane.b32.xlu0 %v1175, 111
        %v1215 = vpop.permute.xlu0 %1214
        %1217 = vrot.lane.b32.xlu0 %v1184, 110
        %v1218 = vpop.permute.xlu0 %1217
        %s1219 = scalar_lea.vmem [#allocation3], 24
        %v1220 = vld [vmem:[%s1219] sm:$0xff]
        %s1221 = scalar_lea.vmem %s2, 24
        %v1222 = vld [vmem:[%s1221] sm:$0xff]
        %1224 = vset.pattern.permute.xlu0 0
        %1225 = vperm.xlu0 %1224, %v1222
        %v1226 = vpop.permute.xlu0 %1225
        %1230 = vrot.lane.b32.xlu0 %v1176, 9
        %v1231 = vpop.permute.xlu0 %1230
        %1232 = vrot.lane.b32.xlu0 %v1177, 9
        %v1233 = vpop.permute.xlu0 %1232
        %1234 = vrot.lane.b32.xlu0 %v1191, 9
        %v1235 = vpop.permute.xlu0 %1234
        %1236 = vrot.lane.b32.xlu0 %v1190, 9
        %v1237 = vpop.permute.xlu0 %1236
        %1238 = vrot.lane.b32.xlu0 %v1198, 9
        %v1239 = vpop.permute.xlu0 %1238
        %1240 = vrot.lane.b32.xlu0 %v1197, 9
        %v1241 = vpop.permute.xlu0 %1240
        %1242 = vrot.lane.b32.xlu0 %v1205, 9
        %v1243 = vpop.permute.xlu0 %1242
        %1244 = vrot.lane.b32.xlu0 %v1204, 9
        %v1245 = vpop.permute.xlu0 %1244
        %1246 = vrot.lane.b32.xlu0 %v1207, 9
        %v1247 = vpop.permute.xlu0 %1246
        %1248 = vrot.lane.b32.xlu0 %v1210, 9
        %v1249 = vpop.permute.xlu0 %1248
        %1250 = vrot.lane.b32.xlu0 %v1213, 9
        %v1251 = vpop.permute.xlu0 %1250
        %1252 = vrot.lane.b32.xlu0 %v1215, 9
        %v1253 = vpop.permute.xlu0 %1252
        %1254 = vrot.lane.b32.xlu0 %v1218, 9
        %v1255 = vpop.permute.xlu0 %1254
        %v1256 = vsel %vm1085, %v1231, %v1233
        %v1257 = vsel %vm1085, %v1235, %v1237
        %v1258 = vsel %vm1085, %v1239, %v1241
        %v1259 = vsel %vm1085, %v1243, %v1245
        %v1270 = vsel %vm510, %v1220, 0
        %1272 = vmatprep.subr.mxu0 0.0
        %1273 = vmatpush1.msra.mxu0 0.0
        %1274 = vmatprep.subr.mxu0 0.0
        %1275 = vmatpush1.msra.mxu0 0.0
        %1276 = vmatprep.subr.mxu0 0.0
        %1277 = vmatpush1.msra.mxu0 0.0
        %1278 = vmatprep.subr.mxu0 0.0
        %1279 = vmatpush1.msra.mxu0 0.0
        %1280 = vmatprep.subr.mxu0 0.0
        %1281 = vmatpush1.msra.mxu0 0.0
        %1282 = vmatprep.subr.mxu0 0.0
        %1283 = vmatpush1.msra.mxu0 0.0
        %1284 = vmatprep.subr.mxu0 0.0
        %1285 = vmatpush1.msra.mxu0 0.0
        %1286 = vmatprep.subr.mxu0 0.0
        %1287 = vmatpush1.msra.mxu0 %v1255
        %1288 = vmatprep.subr.mxu0 0.0
        %1289 = vmatpush1.msra.mxu0 %v1253
        %1290 = vmatprep.subr.mxu0 0.0
        %1291 = vmatpush1.msra.mxu0 %v1251
        %1292 = vmatprep.subr.mxu0 0.0
        %1293 = vmatpush1.msra.mxu0 %v1249
        %1294 = vmatprep.subr.mxu0 0.0
        %1295 = vmatpush1.msra.mxu0 %v1247
        %1296 = vmatprep.subr.mxu0 0.0
        %1297 = vmatpush1.msra.mxu0 %v1259
        %1298 = vmatprep.subr.mxu0 0.0
        %1299 = vmatpush1.msra.mxu0 %v1258
        %1300 = vmatprep.subr.mxu0 0.0
        %1301 = vmatpush1.msra.mxu0 %v1257
        %1302 = vmatprep.subr.mxu0 0.0
        %1303 = vmatpush1.msra.mxu0 %v1256
        %1304 = vmatprep.subr.mxu0 0.0
        %1305 = vmatpush2.msra.mxu0 0.0
        %1306 = vmatprep.subr.mxu0 0.0
        %1307 = vmatpush2.msra.mxu0 0.0
        %1308 = vmatprep.subr.mxu0 0.0
        %1309 = vmatpush2.msra.mxu0 0.0
        %1310 = vmatprep.subr.mxu0 0.0
        %1311 = vmatpush2.msra.mxu0 0.0
        %1312 = vmatprep.subr.mxu0 0.0
        %1313 = vmatpush2.msra.mxu0 0.0
        %1314 = vmatprep.subr.mxu0 0.0
        %1315 = vmatpush2.msra.mxu0 0.0
        %1316 = vmatprep.subr.mxu0 0.0
        %1317 = vmatpush2.msra.mxu0 0.0
        %1318 = vmatprep.subr.mxu0 0.0
        %1319 = vmatpush2.msra.mxu0 0.0
        %1320 = vmatprep.subr.mxu0 0.0
        %1321 = vmatpush2.msra.mxu0 0.0
        %1322 = vmatprep.subr.mxu0 0.0
        %1323 = vmatpush2.msra.mxu0 0.0
        %1324 = vmatprep.subr.mxu0 0.0
        %1325 = vmatpush2.msra.mxu0 0.0
        %1326 = vmatprep.subr.mxu0 0.0
        %1327 = vmatpush2.msra.mxu0 0.0
        %1328 = vmatprep.subr.mxu0 0.0
        %1329 = vmatpush2.msra.mxu0 0.0
        %1330 = vmatprep.subr.mxu0 0.0
        %1331 = vmatpush2.msra.mxu0 0.0
        %1332 = vmatprep.subr.mxu0 0.0
        %1333 = vmatpush2.msra.mxu0 0.0
        %1334 = vmatprep.subr.mxu0 0.0
        %1335 = vmatpush2.msra.mxu0 0.0
        %1336 = vmatprep.mubr.f32.mxu0 0.0
        %1337 = vmatmul.mubr.f32.gmra.mxu0 %v1270
        %v1338 = vpop.f32.mrf.mxu0
        %v1339 = vadd.f32 %v1226, %v1338
        %v1340 = vpop.f32.mrf.mxu0
        %1341 = vdwg.mxu0
        %v1342 = vmax.f32 %v1339, 0.0
        %v1343 = vld [vmem:[%s3] sm:$0xff]
        %v1344 = vld [vmem:[%s3 + $0x8] sm:$0xff]
        %v1345 = vld [vmem:[%s3 + $0x10] sm:$0xff]
        %v1346 = vld [vmem:[%s3 + $0x18] sm:$0xff]
        %v1347 = vld [vmem:[%s3 + $0x20] sm:$0xff]
        %v1348 = vld [vmem:[%s3 + $0x28] sm:$0xff]
        %v1349 = vld [vmem:[%s3 + $0x30] sm:$0xff]
        %v1350 = vld [vmem:[%s3 + $0x38] sm:$0xff]
        %v1351 = vld [vmem:[%s3 + $0x40] sm:$0xff]
        %v1352 = vld [vmem:[%s3 + $0x48] sm:$0xff]
        %v1353 = vld [vmem:[%s3 + $0x50] sm:$0xff]
        %v1354 = vld [vmem:[%s3 + $0x58] sm:$0xff]
        %v1355 = vld [vmem:[%s3 + $0x60] sm:$0xff]
        %v1356 = vld [vmem:[%s3 + $0x68] sm:$0xff]
        %v1357 = vld [vmem:[%s3 + $0x70] sm:$0xff]
        %v1358 = vld [vmem:[%s3 + $0x78] sm:$0xff]
        %s1359 = scalar_lea.vmem %s3, 128
        %v1360 = vld [vmem:[%s1359] ss:$8 sm:$0x3]
        %v1362 = vlaneseq
        %v1363 = vshrl.u32 %v1362, 7
        %v1364 = vsub.s32 0, %v1363
        %v1365 = vrot.slane %v1360, %v1364
        %v1366 = vlaneseq
        %v1367 = vshrl.u32 %v1366, 7
        %v1368 = vsub.s32 1, %v1367
        %v1369 = vrot.slane %v1360, %v1368
        %v1373 = vsel %vm902, %v1342, 0
        %1375 = vmatprep.subr.mxu0 0.0
        %1376 = vmatpush1.msra.mxu0 0.0
        %1377 = vmatprep.subr.mxu0 0.0
        %1378 = vmatpush1.msra.mxu0 0.0
        %1379 = vmatprep.subr.mxu0 0.0
        %1380 = vmatpush1.msra.mxu0 0.0
        %1381 = vmatprep.subr.mxu0 0.0
        %1382 = vmatpush1.msra.mxu0 0.0
        %1383 = vmatprep.subr.mxu0 0.0
        %1384 = vmatpush1.msra.mxu0 0.0
        %1385 = vmatprep.subr.mxu0 0.0
        %1386 = vmatpush1.msra.mxu0 0.0
        %1387 = vmatprep.subr.mxu0 0.0
        %1388 = vmatpush1.msra.mxu0 0.0
        %1389 = vmatprep.subr.mxu0 0.0
        %1390 = vmatpush1.msra.mxu0 0.0
        %1391 = vmatprep.subr.mxu0 %v1358
        %1392 = vmatpush1.msra.mxu0 %v1357
        %1393 = vmatprep.subr.mxu0 %v1356
        %1394 = vmatpush1.msra.mxu0 %v1355
        %1395 = vmatprep.subr.mxu0 %v1354
        %1396 = vmatpush1.msra.mxu0 %v1353
        %1397 = vmatprep.subr.mxu0 %v1352
        %1398 = vmatpush1.msra.mxu0 %v1351
        %1399 = vmatprep.subr.mxu0 %v1350
        %1400 = vmatpush1.msra.mxu0 %v1349
        %1401 = vmatprep.subr.mxu0 %v1348
        %1402 = vmatpush1.msra.mxu0 %v1347
        %1403 = vmatprep.subr.mxu0 %v1346
        %1404 = vmatpush1.msra.mxu0 %v1345
        %1405 = vmatprep.subr.mxu0 %v1344
        %1406 = vmatpush1.msra.mxu0 %v1343
        %1407 = vmatprep.subr.mxu0 0.0
        %1408 = vmatpush2.msra.mxu0 0.0
        %1409 = vmatprep.subr.mxu0 0.0
        %1410 = vmatpush2.msra.mxu0 0.0
        %1411 = vmatprep.subr.mxu0 0.0
        %1412 = vmatpush2.msra.mxu0 0.0
        %1413 = vmatprep.subr.mxu0 0.0
        %1414 = vmatpush2.msra.mxu0 0.0
        %1415 = vmatprep.subr.mxu0 0.0
        %1416 = vmatpush2.msra.mxu0 0.0
        %1417 = vmatprep.subr.mxu0 0.0
        %1418 = vmatpush2.msra.mxu0 0.0
        %1419 = vmatprep.subr.mxu0 0.0
        %1420 = vmatpush2.msra.mxu0 0.0
        %1421 = vmatprep.subr.mxu0 0.0
        %1422 = vmatpush2.msra.mxu0 0.0
        %1423 = vmatprep.subr.mxu0 0.0
        %1424 = vmatpush2.msra.mxu0 0.0
        %1425 = vmatprep.subr.mxu0 0.0
        %1426 = vmatpush2.msra.mxu0 0.0
        %1427 = vmatprep.subr.mxu0 0.0
        %1428 = vmatpush2.msra.mxu0 0.0
        %1429 = vmatprep.subr.mxu0 0.0
        %1430 = vmatpush2.msra.mxu0 0.0
        %1431 = vmatprep.subr.mxu0 0.0
        %1432 = vmatpush2.msra.mxu0 0.0
        %1433 = vmatprep.subr.mxu0 0.0
        %1434 = vmatpush2.msra.mxu0 0.0
        %1435 = vmatprep.subr.mxu0 0.0
        %1436 = vmatpush2.msra.mxu0 0.0
        %1437 = vmatprep.subr.mxu0 0.0
        %1438 = vmatpush2.msra.mxu0 0.0
        %1439 = vmatprep.mubr.f32.mxu0 0.0
        %1440 = vmatmul.mubr.f32.gmra.mxu0 %v1373
        %v1441 = vpop.f32.mrf.mxu0
        %v1442 = vadd.f32 %v1365, %v1441
        %v1443 = vpop.f32.mrf.mxu0
        %v1444 = vadd.f32 %v1369, %v1443
        %1445 = vdwg.mxu0
        %v1446 = vmax.f32 %v1442, 0.0
        %v1447 = vmax.f32 %v1444, 0.0
        %1448 = vst [vmem:[%s212] sm:$0xff] %v1446
        %1449 = vst [vmem:[%s212 + $0x8] sm:$0xff] %v1447
        %p1450 = scmp.lt.s32.totalorder %s16, 1
        %s1451 = scalar_select %p1450, %s16, 1
        %s1452 = smul.addr %s1451, 2
        %s1453 = smul.addr %s1452, 8
        %s1454 = scalar_lea.vmem %s4, %s1453
        // Predicated region
        $region41: #{vae_encoder_forward.1} parent=35 // pred_check
          %p1455 = pneg %p123
        $region42: #{vae_encoder_forward.1} parent=35 // pred_check_branch
          %1457 = sbr.rel (%p1455) target = $region44
        $region43: #{vae_encoder_forward.1} parent=35 // pred_region
          _
        $region44: #{vae_encoder_forward.1} parent=35 // pred_fallthru
          _
      $region36: #{vae_encoder_forward.1} parent=5 // pred_fallthru
        _
      %p1458 = scmp.le.s32.totalorder 2, %s11
      // Predicated region
      $region45: #{vae_encoder_forward.1} parent=5 // pred_check
        %p1459 = pneg %p1458
      $region46: #{vae_encoder_forward.1} parent=5 // pred_check_branch
        %1461 = sbr.rel (%p1459) target = $region48
      $region47: #{vae_encoder_forward.1} parent=5 // pred_region
        %s1462 = ssub.s32 %s11, 2
        // Predicated region
        $region49: #{vae_encoder_forward.1} parent=47 // pred_check
          %p1463 = pneg %p129
        $region50: #{vae_encoder_forward.1} parent=47 // pred_check_branch
          %1465 = sbr.rel (%p1463) target = $region52
        $region51: #{vae_encoder_forward.1} parent=47 // pred_region
          %p1466 = scmp.lt.s32.totalorder %s17, 1
          %s1467 = scalar_select %p1466, %s17, 1
          %s1468 = smul.addr %s1467, 2
          %s1469 = smul.addr %s1468, 8
          %s1470 = scalar_lea.vmem %s4, %s1469
        $region52: #{vae_encoder_forward.1} parent=47 // pred_fallthru
          _
      $region48: #{vae_encoder_forward.1} parent=5 // pred_fallthru
        _
    $region6: #{vae_encoder_forward.1} parent=1 // loop_footer
      %s15 = sadd.s32 1, %s11
    $region7: #{vae_encoder_forward.1} parent=1 // loop_footer_branch
      %10 = sbr.rel target = $region3
    $region8: #{vae_encoder_forward.1} parent=1 // loop_exit
      _
    %1471 = vsyncpa [#allocation4], 1
    %s1472 = scalar_lea.sflag [#allocation4], 1
    %1473 = vsyncpa %s1472, 1

</llo_original>
